<compile_context>
chip_gen: v7x
topology: tpu7x:2x2x1
jax: 0.10.0
libtpu: 0.0.40
codegen_flags: <defaults>
</compile_context>

<pallas_src>
import jax
import jax.numpy as jnp
from jax import lax
from jax.experimental import pallas as pl
from jax.experimental.pallas import tpu as pltpu

INPUT_SIZE = 13
H1 = 10
H2 = 8
OUTPUT_SIZE = 1

# Max batch rows per grid step.  32768 f32 rows of x is ~1.6 MiB per block
# (~3.3 MiB double-buffered): big enough to amortize per-grid-step overhead on
# every generation, small enough for v5e's 16 MiB scoped-VMEM default and
# v7x's 64 MiB/TC.  (Raise to 64-128K on v6e/v7x if desired; set
# vmem_limit_bytes in CompilerParams if you exceed the scoped default.)
MAX_TILE = 32768
# Tiles rounded to a multiple of this (keeps (8, 128) block constraints
# satisfied for both the x block and the lane-dense output block).
TILE_QUANTUM = 1024


def _round_up(n, m):
    return ((n + m - 1) // m) * m


def mlp_kernel(x_ref, w1_ref, b1_ref, w2_ref, b2_ref, w3_ref, b3_ref, o_ref):
    """Transposed (batch-on-lanes) fc1 -> relu -> fc2 -> relu -> fc3 per tile."""
    x = x_ref[...].astype(jnp.float32)                               # (TILE, 13)
    # h1T = W1 . xT : contract x's lane axis -> (10, TILE), batch on lanes.
    h1t = lax.dot_general(
        w1_ref[...], x, (((1,), (1,)), ((), ())),
        preferred_element_type=jnp.float32) + b1_ref[...]            # (10, TILE)
    h1t = jnp.maximum(h1t, 0.0)
    h2t = jnp.dot(w2_ref[...], h1t,
                  preferred_element_type=jnp.float32) + b2_ref[...]  # (8, TILE)
    h2t = jnp.maximum(h2t, 0.0)
    yt = jnp.dot(w3_ref[...], h2t,
                 preferred_element_type=jnp.float32) + b3_ref[...]   # (1, TILE)
    o_ref[...] = yt.astype(o_ref.dtype)                              # lane-dense store


def mlp_forward(x, params, *, max_tile=MAX_TILE, stream_dtype=None):
    """Batch-tiled, auto-double-buffered pipelined forward pass."""
    w1, b1, w2, b2, w3, b3 = params
    batch = x.shape[0]

    if stream_dtype is not None and x.dtype != stream_dtype:
        # Halves the dominant HBM stream; accumulation and params stay f32.
        x = x.astype(stream_dtype)

    tile = min(max_tile, _round_up(batch, TILE_QUANTUM))
    num_tiles = pl.cdiv(batch, tile)

    def resident(p):
        # Full-array block with a constant index map: stays resident in VMEM,
        # no re-issued DMA per batch tile.
        return pl.BlockSpec(p.shape, lambda i: (0, 0))

    flops = 2 * batch * (INPUT_SIZE * H1 + H1 * H2 + H2 * OUTPUT_SIZE)
    bytes_accessed = int(
        batch * INPUT_SIZE * x.dtype.itemsize
        + batch * OUTPUT_SIZE * 4
        + sum(int(p.size) * p.dtype.itemsize for p in params))

    out = pl.pallas_call(
        mlp_kernel,
        out_shape=jax.ShapeDtypeStruct((1, batch), jnp.float32),
        grid=(num_tiles,),
        in_specs=[
            pl.BlockSpec((tile, INPUT_SIZE), lambda i: (i, 0)),   # streamed x
            resident(w1), resident(b1),
            resident(w2), resident(b2),
            resident(w3), resident(b3),
        ],
        # Batch on the lane axis -> dense, unmasked output stores / writeback.
        out_specs=pl.BlockSpec((1, tile), lambda i: (0, i)),
        compiler_params=pltpu.CompilerParams(
            dimension_semantics=("parallel",)),   # shards batch tiles over v7x's 2 TCs
        cost_estimate=pl.CostEstimate(
            flops=flops, transcendentals=0, bytes_accessed=bytes_accessed),
    )(x, w1, b1, w2, b2, w3, b3)

    # (1, batch) row-major flattens to the same order as (batch, 1): free reshape.
    return out.reshape(batch, OUTPUT_SIZE)


def init_params(key):
    """Deterministic init mimicking nn.Linear default (uniform +-1/sqrt(fan_in)).

    Weights are stored in the PyTorch (out, in) orientation; biases as (out, 1)
    so they broadcast directly onto the transposed (out, TILE) intermediates.
    """
    ks = jax.random.split(key, 6)

    def uniform(k, shape, fan_in):
        bound = 1.0 / jnp.sqrt(float(fan_in))
        return jax.random.uniform(k, shape, jnp.float32, -bound, bound)

    w1 = uniform(ks[0], (H1, INPUT_SIZE), INPUT_SIZE)      # (10, 13)
    b1 = uniform(ks[1], (H1, 1), INPUT_SIZE)               # (10, 1)
    w2 = uniform(ks[2], (H2, H1), H1)                      # (8, 10)
    b2 = uniform(ks[3], (H2, 1), H1)                       # (8, 1)
    w3 = uniform(ks[4], (OUTPUT_SIZE, H2), H2)             # (1, 8)
    b3 = uniform(ks[5], (OUTPUT_SIZE, 1), H2)              # (1, 1)
    return (w1, b1, w2, b2, w3, b3)


def reference_forward(x, params):
    w1, b1, w2, b2, w3, b3 = params
    h1 = jnp.maximum(x @ w1.T + b1[:, 0], 0.0)
    h2 = jnp.maximum(h1 @ w2.T + b2[:, 0], 0.0)
    return h2 @ w3.T + b3[:, 0]


if __name__ == "__main__":
    key = jax.random.PRNGKey(0)
    k_x, k_p = jax.random.split(key)

    # Ragged batch (not a tile multiple) to exercise the partial-block path
    # without any wrapper-side padding.
    batch = 2000
    x = jax.random.normal(k_x, (batch, INPUT_SIZE), dtype=jnp.float32)
    params = init_params(k_p)
    ref = reference_forward(x, params)

    # 1) Default large-tile path (single ragged tile here).
    out = jax.block_until_ready(mlp_forward(x, params))
    assert out.shape == (batch, OUTPUT_SIZE)
    assert jnp.allclose(out, ref, atol=1e-4, rtol=1e-4), float(
        jnp.max(jnp.abs(out - ref)))

    # 2) Multi-tile path: force 2 batch tiles (one full + one ragged) to
    #    exercise the pipelined grid and boundary-block handling.
    out_mt = jax.block_until_ready(mlp_forward(x, params, max_tile=1024))
    assert jnp.allclose(out_mt, ref, atol=1e-4, rtol=1e-4), float(
        jnp.max(jnp.abs(out_mt - ref)))

    # 3) Optional bf16 streaming of x (halves input HBM bytes); f32 accumulate.
    out_bf16 = jax.block_until_ready(
        mlp_forward(x, params, stream_dtype=jnp.bfloat16))
    assert jnp.allclose(out_bf16, ref, atol=1e-1, rtol=1e-1), float(
        jnp.max(jnp.abs(out_bf16 - ref)))

    print("KERNEL_OK")
</pallas_src>

<mosaic_0001>
module attributes {stable_mosaic.version = 11 : i64} {
  func.func @mlp_kernel(%arg0: i32, %arg1: memref<2048x13xf32, #tpu.memory_space<vmem>>, %arg2: memref<10x13xf32, #tpu.memory_space<vmem>>, %arg3: memref<10x1xf32, #tpu.memory_space<vmem>>, %arg4: memref<8x10xf32, #tpu.memory_space<vmem>>, %arg5: memref<8x1xf32, #tpu.memory_space<vmem>>, %arg6: memref<1x8xf32, #tpu.memory_space<vmem>>, %arg7: memref<1x1xf32, #tpu.memory_space<vmem>>, %arg8: memref<1x2048xf32, #tpu.memory_space<vmem>>) attributes {dimension_semantics = [#tpu.dimension_semantics<parallel>], iteration_bounds = array<i64: 1>, scalar_prefetch = 0 : i64, scratch_operands = 0 : i64, tpu.core_type = #tpu.core_type<tc>, window_params = [{transform_indices = @transform_0, window_bounds = array<i64: 2048, 13>}, {pipeline_mode = #tpu.pipeline_mode<synchronous>, transform_indices = @transform_1, window_bounds = array<i64: 10, 13>}, {pipeline_mode = #tpu.pipeline_mode<synchronous>, transform_indices = @transform_2, window_bounds = array<i64: 10, 1>}, {pipeline_mode = #tpu.pipeline_mode<synchronous>, transform_indices = @transform_3, window_bounds = array<i64: 8, 10>}, {pipeline_mode = #tpu.pipeline_mode<synchronous>, transform_indices = @transform_4, window_bounds = array<i64: 8, 1>}, {pipeline_mode = #tpu.pipeline_mode<synchronous>, transform_indices = @transform_5, window_bounds = array<i64: 1, 8>}, {pipeline_mode = #tpu.pipeline_mode<synchronous>, transform_indices = @transform_6, window_bounds = array<i64: 1, 1>}, {transform_indices = @transform_7, window_bounds = array<i64: 1, 2048>}]} {
    %c0 = arith.constant 0 : index
    %c0_0 = arith.constant 0 : index
    %0 = vector.load %arg1[%c0, %c0_0] : memref<2048x13xf32, #tpu.memory_space<vmem>>, vector<2048x13xf32>
    %c0_1 = arith.constant 0 : index
    %c0_2 = arith.constant 0 : index
    %1 = vector.load %arg2[%c0_1, %c0_2] : memref<10x13xf32, #tpu.memory_space<vmem>>, vector<10x13xf32>
    %cst = arith.constant dense<0.000000e+00> : vector<10x2048xf32>
    %2 = tpu.matmul %1, %0, %cst {dimension_numbers = #tpu.dot_dimension_numbers<[1], [1], [0], [0], [0, 0, 1, 0], [], []>} : vector<10x13xf32>, vector<2048x13xf32>, vector<10x2048xf32> -> vector<10x2048xf32>
    %c0_3 = arith.constant 0 : index
    %c0_4 = arith.constant 0 : index
    %3 = vector.load %arg3[%c0_3, %c0_4] : memref<10x1xf32, #tpu.memory_space<vmem>>, vector<10x1xf32>
    %4 = vector.broadcast %3 : vector<10x1xf32> to vector<10x2048xf32>
    %5 = arith.addf %2, %4 : vector<10x2048xf32>
    %cst_5 = arith.constant 0.000000e+00 : f32
    %6 = vector.broadcast %cst_5 : f32 to vector<10x2048xf32>
    %7 = arith.maximumf %5, %6 : vector<10x2048xf32>
    %c0_6 = arith.constant 0 : index
    %c0_7 = arith.constant 0 : index
    %8 = vector.load %arg4[%c0_6, %c0_7] : memref<8x10xf32, #tpu.memory_space<vmem>>, vector<8x10xf32>
    %cst_8 = arith.constant dense<0.000000e+00> : vector<8x2048xf32>
    %9 = tpu.matmul %8, %7, %cst_8 {dimension_numbers = #tpu.dot_dimension_numbers<[1], [0], [0], [1], [0, 0, 1, 1], [], []>} : vector<8x10xf32>, vector<10x2048xf32>, vector<8x2048xf32> -> vector<8x2048xf32>
    %c0_9 = arith.constant 0 : index
    %c0_10 = arith.constant 0 : index
    %10 = vector.load %arg5[%c0_9, %c0_10] : memref<8x1xf32, #tpu.memory_space<vmem>>, vector<8x1xf32>
    %11 = vector.broadcast %10 : vector<8x1xf32> to vector<8x2048xf32>
    %12 = arith.addf %9, %11 : vector<8x2048xf32>
    %cst_11 = arith.constant 0.000000e+00 : f32
    %13 = vector.broadcast %cst_11 : f32 to vector<8x2048xf32>
    %14 = arith.maximumf %12, %13 : vector<8x2048xf32>
    %c0_12 = arith.constant 0 : index
    %c0_13 = arith.constant 0 : index
    %15 = vector.load %arg6[%c0_12, %c0_13] : memref<1x8xf32, #tpu.memory_space<vmem>>, vector<1x8xf32>
    %cst_14 = arith.constant dense<0.000000e+00> : vector<1x2048xf32>
    %16 = tpu.matmul %15, %14, %cst_14 {dimension_numbers = #tpu.dot_dimension_numbers<[1], [0], [0], [1], [0, 0, 1, 1], [], []>} : vector<1x8xf32>, vector<8x2048xf32>, vector<1x2048xf32> -> vector<1x2048xf32>
    %c0_15 = arith.constant 0 : index
    %c0_16 = arith.constant 0 : index
    %17 = vector.load %arg7[%c0_15, %c0_16] : memref<1x1xf32, #tpu.memory_space<vmem>>, vector<1x1xf32>
    %18 = vector.broadcast %17 : vector<1x1xf32> to vector<1x2048xf32>
    %19 = arith.addf %16, %18 : vector<1x2048xf32>
    %c0_17 = arith.constant 0 : index
    %c0_18 = arith.constant 0 : index
    %20 = vector.load %arg8[%c0_17, %c0_18] : memref<1x2048xf32, #tpu.memory_space<vmem>>, vector<1x2048xf32>
    tpu.vector_store %arg8[%c0_17, %c0_18], %19 {strides = array<i32>} : memref<1x2048xf32, #tpu.memory_space<vmem>>, vector<1x2048xf32>,
    return
  }
  func.func @transform_0(%arg0: i32) -> (i32, i32) {
    %c0_i32 = arith.constant 0 : i32
    %c0_i32_0 = arith.constant 0 : i32
    return %arg0, %c0_i32 : i32, i32
  }
  func.func @transform_1(%arg0: i32) -> (i32, i32) {
    %c0_i32 = arith.constant 0 : i32
    %c0_i32_0 = arith.constant 0 : i32
    %c0_i32_1 = arith.constant 0 : i32
    return %c0_i32, %c0_i32_0 : i32, i32
  }
  func.func @transform_2(%arg0: i32) -> (i32, i32) {
    %c0_i32 = arith.constant 0 : i32
    %c0_i32_0 = arith.constant 0 : i32
    %c0_i32_1 = arith.constant 0 : i32
    return %c0_i32, %c0_i32_0 : i32, i32
  }
  func.func @transform_3(%arg0: i32) -> (i32, i32) {
    %c0_i32 = arith.constant 0 : i32
    %c0_i32_0 = arith.constant 0 : i32
    %c0_i32_1 = arith.constant 0 : i32
    return %c0_i32, %c0_i32_0 : i32, i32
  }
  func.func @transform_4(%arg0: i32) -> (i32, i32) {
    %c0_i32 = arith.constant 0 : i32
    %c0_i32_0 = arith.constant 0 : i32
    %c0_i32_1 = arith.constant 0 : i32
    return %c0_i32, %c0_i32_0 : i32, i32
  }
  func.func @transform_5(%arg0: i32) -> (i32, i32) {
    %c0_i32 = arith.constant 0 : i32
    %c0_i32_0 = arith.constant 0 : i32
    %c0_i32_1 = arith.constant 0 : i32
    return %c0_i32, %c0_i32_0 : i32, i32
  }
  func.func @transform_6(%arg0: i32) -> (i32, i32) {
    %c0_i32 = arith.constant 0 : i32
    %c0_i32_0 = arith.constant 0 : i32
    %c0_i32_1 = arith.constant 0 : i32
    return %c0_i32, %c0_i32_0 : i32, i32
  }
  func.func @transform_7(%arg0: i32) -> (i32, i32) {
    %c0_i32 = arith.constant 0 : i32
    %c0_i32_0 = arith.constant 0 : i32
    return %c0_i32, %arg0 : i32, i32
  }
}

</mosaic_0001>

<llo_original>
// kernel: tpu_custom_call.1
$region0: #{tpu_custom_call.1}
  #allocation0 [shape = 'u32[]', space=smem, size = 0x4, offset = 0x4, fixed_abs, tag = 'smem constant byte address 0x4 - core index']
  #allocation1 [shape = 'u32[144,128]{1,0:T(1,128)}', space=vmem, size = 0x12000, scoped, tag = 'internal scratch']
  #allocation2 [shape = 'f32[1,1]{1,0:T(1,128)S(1)}', space=vmem, size = 0x200, scoped, tag = 'scoped memory for tpu_custom_call.1']
  %s0 = inlined_call_operand.vmem [shape: f32[2000,13], index: 0, kind: input, shape index: {}]
  %s1 = inlined_call_operand.vmem [shape: f32[10,13], index: 1, kind: input, shape index: {}]
  %s2 = inlined_call_operand.vmem [shape: f32[10,1], index: 2, kind: input, shape index: {}]
  %s3 = inlined_call_operand.vmem [shape: f32[8,10], index: 3, kind: input, shape index: {}]
  %s4 = inlined_call_operand.vmem [shape: f32[8,1], index: 4, kind: input, shape index: {}]
  %s5 = inlined_call_operand.vmem [shape: f32[1,8], index: 5, kind: input, shape index: {}]
  %s6 = inlined_call_operand.<no memory space> [shape: f32[1,1], index: 6, kind: input, shape index: {}]
  %s7 = inlined_call_operand.hbm [shape: f32[1,2000], index: 7, kind: output, shape index: {}]
  %s8 = sld [smem:[#allocation0]]
  $region38: #{tpu_custom_call.1} parent=0
    _
  %s10 = ssub.s32 1, %s8
  %s11 = scalar_select 0, %s10, %s8
  %v12 = vstv %s6
  %13 = vst [vmem:[#allocation2] sm:$0x1] %v12
  $region1: #{tpu_custom_call.1} parent=0
    #allocation3 [shape = 'u8[8192]{0}', space=vmem, size = 0x2000, scoped, tag = 'output window, operand 0, single buffered']
    #allocation4 [shape = 's32[1]{0}', space=sflag, size = 0x4, scoped, tag = 'scoped memory for tpu_custom_call.1']
    %14 = vsyncpa [#allocation4], 0
    // Predicated region
    $region2: #{tpu_custom_call.1} parent=1 // pred_check
      _
    $region3: #{tpu_custom_call.1} parent=1 // pred_check_branch
      %16 = sbr.rel (0) target = $region5
    $region4: #{tpu_custom_call.1} parent=1 // pred_region
      _
    $region5: #{tpu_custom_call.1} parent=1 // pred_fallthru
      _
    // Predicated region
    $region6: #{tpu_custom_call.1} parent=1 // pred_check
      _
    $region7: #{tpu_custom_call.1} parent=1 // pred_check_branch
      %18 = sbr.rel (0) target = $region9
    $region8: #{tpu_custom_call.1} parent=1 // pred_region
      _
    $region9: #{tpu_custom_call.1} parent=1 // pred_fallthru
      _
    // Predicated region
    $region10: #{tpu_custom_call.1} parent=1 // pred_check
      _
    $region11: #{tpu_custom_call.1} parent=1 // pred_check_branch
      %20 = sbr.rel (0) target = $region13
    $region12: #{tpu_custom_call.1} parent=1 // pred_region
      _
    $region13: #{tpu_custom_call.1} parent=1 // pred_fallthru
      _
    // Predicated region
    $region14: #{tpu_custom_call.1} parent=1 // pred_check
      _
    $region15: #{tpu_custom_call.1} parent=1 // pred_check_branch
      %22 = sbr.rel (0) target = $region17
    $region16: #{tpu_custom_call.1} parent=1 // pred_region
      _
    $region17: #{tpu_custom_call.1} parent=1 // pred_fallthru
      _
    // Predicated region
    $region18: #{tpu_custom_call.1} parent=1 // pred_check
      _
    $region19: #{tpu_custom_call.1} parent=1 // pred_check_branch
      %24 = sbr.rel (0) target = $region21
    $region20: #{tpu_custom_call.1} parent=1 // pred_region
      _
    $region21: #{tpu_custom_call.1} parent=1 // pred_fallthru
      _
    // Predicated region
    $region22: #{tpu_custom_call.1} parent=1 // pred_check
      _
    $region23: #{tpu_custom_call.1} parent=1 // pred_check_branch
      %26 = sbr.rel (0) target = $region25
    $region24: #{tpu_custom_call.1} parent=1 // pred_region
      _
    $region25: #{tpu_custom_call.1} parent=1 // pred_fallthru
      _
    // Predicated region
    $region26: #{tpu_custom_call.1} parent=1 // pred_check
      _
    $region27: #{tpu_custom_call.1} parent=1 // pred_check_branch
      %28 = sbr.rel (0) target = $region29
    $region28: #{tpu_custom_call.1} parent=1 // pred_region
      _
    $region29: #{tpu_custom_call.1} parent=1 // pred_fallthru
      _
    %v29 = vld [vmem:[%s0] sm:$0xff]
    %v30 = vld [vmem:[%s0 + $0x8] sm:$0xff]
    %v31 = vld [vmem:[%s0 + $0x10] sm:$0xff]
    %v32 = vld [vmem:[%s0 + $0x18] sm:$0xff]
    %v33 = vld [vmem:[%s0 + $0x20] sm:$0xff]
    %v34 = vld [vmem:[%s0 + $0x28] sm:$0xff]
    %v35 = vld [vmem:[%s0 + $0x30] sm:$0xff]
    %v36 = vld [vmem:[%s0 + $0x38] sm:$0xff]
    %v37 = vld [vmem:[%s0 + $0x40] sm:$0xff]
    %v38 = vld [vmem:[%s0 + $0x48] sm:$0xff]
    %v39 = vld [vmem:[%s0 + $0x50] sm:$0xff]
    %v40 = vld [vmem:[%s0 + $0x58] sm:$0xff]
    %v41 = vld [vmem:[%s0 + $0x60] sm:$0xff]
    %v42 = vld [vmem:[%s0 + $0x68] sm:$0xff]
    %v43 = vld [vmem:[%s0 + $0x70] sm:$0xff]
    %v44 = vld [vmem:[%s0 + $0x78] sm:$0xff]
    %v45 = vld [vmem:[%s0 + $0x80] sm:$0xff]
    %v46 = vld [vmem:[%s0 + $0x88] sm:$0xff]
    %v47 = vld [vmem:[%s0 + $0x90] sm:$0xff]
    %v48 = vld [vmem:[%s0 + $0x98] sm:$0xff]
    %v49 = vld [vmem:[%s0 + $0xa0] sm:$0xff]
    %v50 = vld [vmem:[%s0 + $0xa8] sm:$0xff]
    %v51 = vld [vmem:[%s0 + $0xb0] sm:$0xff]
    %v52 = vld [vmem:[%s0 + $0xb8] sm:$0xff]
    %v53 = vld [vmem:[%s0 + $0xc0] sm:$0xff]
    %v54 = vld [vmem:[%s0 + $0xc8] sm:$0xff]
    %v55 = vld [vmem:[%s0 + $0xd0] sm:$0xff]
    %v56 = vld [vmem:[%s0 + $0xd8] sm:$0xff]
    %v57 = vld [vmem:[%s0 + $0xe0] sm:$0xff]
    %v58 = vld [vmem:[%s0 + $0xe8] sm:$0xff]
    %v59 = vld [vmem:[%s0 + $0xf0] sm:$0xff]
    %v60 = vld [vmem:[%s0 + $0xf8] sm:$0xff]
    %v61 = vld [vmem:[%s0 + $0x100] sm:$0xff]
    %v62 = vld [vmem:[%s0 + $0x108] sm:$0xff]
    %v63 = vld [vmem:[%s0 + $0x110] sm:$0xff]
    %v64 = vld [vmem:[%s0 + $0x118] sm:$0xff]
    %v65 = vld [vmem:[%s0 + $0x120] sm:$0xff]
    %v66 = vld [vmem:[%s0 + $0x128] sm:$0xff]
    %v67 = vld [vmem:[%s0 + $0x130] sm:$0xff]
    %v68 = vld [vmem:[%s0 + $0x138] sm:$0xff]
    %v69 = vld [vmem:[%s0 + $0x140] sm:$0xff]
    %v70 = vld [vmem:[%s0 + $0x148] sm:$0xff]
    %v71 = vld [vmem:[%s0 + $0x150] sm:$0xff]
    %v72 = vld [vmem:[%s0 + $0x158] sm:$0xff]
    %v73 = vld [vmem:[%s0 + $0x160] sm:$0xff]
    %v74 = vld [vmem:[%s0 + $0x168] sm:$0xff]
    %v75 = vld [vmem:[%s0 + $0x170] sm:$0xff]
    %v76 = vld [vmem:[%s0 + $0x178] sm:$0xff]
    %v77 = vld [vmem:[%s0 + $0x180] sm:$0xff]
    %v78 = vld [vmem:[%s0 + $0x188] sm:$0xff]
    %v79 = vld [vmem:[%s0 + $0x190] sm:$0xff]
    %v80 = vld [vmem:[%s0 + $0x198] sm:$0xff]
    %v81 = vld [vmem:[%s0 + $0x1a0] sm:$0xff]
    %v82 = vld [vmem:[%s0 + $0x1a8] sm:$0xff]
    %v83 = vld [vmem:[%s0 + $0x1b0] sm:$0xff]
    %v84 = vld [vmem:[%s0 + $0x1b8] sm:$0xff]
    %v85 = vld [vmem:[%s0 + $0x1c0] sm:$0xff]
    %v86 = vld [vmem:[%s0 + $0x1c8] sm:$0xff]
    %v87 = vld [vmem:[%s0 + $0x1d0] sm:$0xff]
    %v88 = vld [vmem:[%s0 + $0x1d8] sm:$0xff]
    %v89 = vld [vmem:[%s0 + $0x1e0] sm:$0xff]
    %v90 = vld [vmem:[%s0 + $0x1e8] sm:$0xff]
    %v91 = vld [vmem:[%s0 + $0x1f0] sm:$0xff]
    %v92 = vld [vmem:[%s0 + $0x1f8] sm:$0xff]
    %v93 = vld [vmem:[%s0 + $0x200] sm:$0xff]
    %v94 = vld [vmem:[%s0 + $0x208] sm:$0xff]
    %v95 = vld [vmem:[%s0 + $0x210] sm:$0xff]
    %v96 = vld [vmem:[%s0 + $0x218] sm:$0xff]
    %v97 = vld [vmem:[%s0 + $0x220] sm:$0xff]
    %v98 = vld [vmem:[%s0 + $0x228] sm:$0xff]
    %v99 = vld [vmem:[%s0 + $0x230] sm:$0xff]
    %v100 = vld [vmem:[%s0 + $0x238] sm:$0xff]
    %v101 = vld [vmem:[%s0 + $0x240] sm:$0xff]
    %v102 = vld [vmem:[%s0 + $0x248] sm:$0xff]
    %v103 = vld [vmem:[%s0 + $0x250] sm:$0xff]
    %v104 = vld [vmem:[%s0 + $0x258] sm:$0xff]
    %v105 = vld [vmem:[%s0 + $0x260] sm:$0xff]
    %v106 = vld [vmem:[%s0 + $0x268] sm:$0xff]
    %v107 = vld [vmem:[%s0 + $0x270] sm:$0xff]
    %v108 = vld [vmem:[%s0 + $0x278] sm:$0xff]
    %v109 = vld [vmem:[%s0 + $0x280] sm:$0xff]
    %v110 = vld [vmem:[%s0 + $0x288] sm:$0xff]
    %v111 = vld [vmem:[%s0 + $0x290] sm:$0xff]
    %v112 = vld [vmem:[%s0 + $0x298] sm:$0xff]
    %v113 = vld [vmem:[%s0 + $0x2a0] sm:$0xff]
    %v114 = vld [vmem:[%s0 + $0x2a8] sm:$0xff]
    %v115 = vld [vmem:[%s0 + $0x2b0] sm:$0xff]
    %v116 = vld [vmem:[%s0 + $0x2b8] sm:$0xff]
    %v117 = vld [vmem:[%s0 + $0x2c0] sm:$0xff]
    %v118 = vld [vmem:[%s0 + $0x2c8] sm:$0xff]
    %v119 = vld [vmem:[%s0 + $0x2d0] sm:$0xff]
    %v120 = vld [vmem:[%s0 + $0x2d8] sm:$0xff]
    %v121 = vld [vmem:[%s0 + $0x2e0] sm:$0xff]
    %v122 = vld [vmem:[%s0 + $0x2e8] sm:$0xff]
    %v123 = vld [vmem:[%s0 + $0x2f0] sm:$0xff]
    %v124 = vld [vmem:[%s0 + $0x2f8] sm:$0xff]
    %v125 = vld [vmem:[%s0 + $0x300] sm:$0xff]
    %v126 = vld [vmem:[%s0 + $0x308] sm:$0xff]
    %v127 = vld [vmem:[%s0 + $0x310] sm:$0xff]
    %v128 = vld [vmem:[%s0 + $0x318] sm:$0xff]
    %v129 = vld [vmem:[%s0 + $0x320] sm:$0xff]
    %v130 = vld [vmem:[%s0 + $0x328] sm:$0xff]
    %v131 = vld [vmem:[%s0 + $0x330] sm:$0xff]
    %v132 = vld [vmem:[%s0 + $0x338] sm:$0xff]
    %v133 = vld [vmem:[%s0 + $0x340] sm:$0xff]
    %v134 = vld [vmem:[%s0 + $0x348] sm:$0xff]
    %v135 = vld [vmem:[%s0 + $0x350] sm:$0xff]
    %v136 = vld [vmem:[%s0 + $0x358] sm:$0xff]
    %v137 = vld [vmem:[%s0 + $0x360] sm:$0xff]
    %v138 = vld [vmem:[%s0 + $0x368] sm:$0xff]
    %v139 = vld [vmem:[%s0 + $0x370] sm:$0xff]
    %v140 = vld [vmem:[%s0 + $0x378] sm:$0xff]
    %v141 = vld [vmem:[%s0 + $0x380] sm:$0xff]
    %v142 = vld [vmem:[%s0 + $0x388] sm:$0xff]
    %v143 = vld [vmem:[%s0 + $0x390] sm:$0xff]
    %v144 = vld [vmem:[%s0 + $0x398] sm:$0xff]
    %v145 = vld [vmem:[%s0 + $0x3a0] sm:$0xff]
    %v146 = vld [vmem:[%s0 + $0x3a8] sm:$0xff]
    %v147 = vld [vmem:[%s0 + $0x3b0] sm:$0xff]
    %v148 = vld [vmem:[%s0 + $0x3b8] sm:$0xff]
    %v149 = vld [vmem:[%s0 + $0x3c0] sm:$0xff]
    %v150 = vld [vmem:[%s0 + $0x3c8] sm:$0xff]
    %v151 = vld [vmem:[%s0 + $0x3d0] sm:$0xff]
    %v152 = vld [vmem:[%s0 + $0x3d8] sm:$0xff]
    %v153 = vld [vmem:[%s0 + $0x3e0] sm:$0xff]
    %v154 = vld [vmem:[%s0 + $0x3e8] sm:$0xff]
    %v155 = vld [vmem:[%s0 + $0x3f0] sm:$0xff]
    %v156 = vld [vmem:[%s0 + $0x3f8] sm:$0xff]
    %v157 = vld [vmem:[%s0 + $0x400] sm:$0xff]
    %v158 = vld [vmem:[%s0 + $0x408] sm:$0xff]
    %v159 = vld [vmem:[%s0 + $0x410] sm:$0xff]
    %v160 = vld [vmem:[%s0 + $0x418] sm:$0xff]
    %v161 = vld [vmem:[%s0 + $0x420] sm:$0xff]
    %v162 = vld [vmem:[%s0 + $0x428] sm:$0xff]
    %v163 = vld [vmem:[%s0 + $0x430] sm:$0xff]
    %v164 = vld [vmem:[%s0 + $0x438] sm:$0xff]
    %v165 = vld [vmem:[%s0 + $0x440] sm:$0xff]
    %v166 = vld [vmem:[%s0 + $0x448] sm:$0xff]
    %v167 = vld [vmem:[%s0 + $0x450] sm:$0xff]
    %v168 = vld [vmem:[%s0 + $0x458] sm:$0xff]
    %v169 = vld [vmem:[%s0 + $0x460] sm:$0xff]
    %v170 = vld [vmem:[%s0 + $0x468] sm:$0xff]
    %v171 = vld [vmem:[%s0 + $0x470] sm:$0xff]
    %v172 = vld [vmem:[%s0 + $0x478] sm:$0xff]
    %v173 = vld [vmem:[%s0 + $0x480] sm:$0xff]
    %v174 = vld [vmem:[%s0 + $0x488] sm:$0xff]
    %v175 = vld [vmem:[%s0 + $0x490] sm:$0xff]
    %v176 = vld [vmem:[%s0 + $0x498] sm:$0xff]
    %v177 = vld [vmem:[%s0 + $0x4a0] sm:$0xff]
    %v178 = vld [vmem:[%s0 + $0x4a8] sm:$0xff]
    %v179 = vld [vmem:[%s0 + $0x4b0] sm:$0xff]
    %v180 = vld [vmem:[%s0 + $0x4b8] sm:$0xff]
    %v181 = vld [vmem:[%s0 + $0x4c0] sm:$0xff]
    %v182 = vld [vmem:[%s0 + $0x4c8] sm:$0xff]
    %v183 = vld [vmem:[%s0 + $0x4d0] sm:$0xff]
    %v184 = vld [vmem:[%s0 + $0x4d8] sm:$0xff]
    %v185 = vld [vmem:[%s0 + $0x4e0] sm:$0xff]
    %v186 = vld [vmem:[%s0 + $0x4e8] sm:$0xff]
    %v187 = vld [vmem:[%s0 + $0x4f0] sm:$0xff]
    %v188 = vld [vmem:[%s0 + $0x4f8] sm:$0xff]
    %v189 = vld [vmem:[%s0 + $0x500] sm:$0xff]
    %v190 = vld [vmem:[%s0 + $0x508] sm:$0xff]
    %v191 = vld [vmem:[%s0 + $0x510] sm:$0xff]
    %v192 = vld [vmem:[%s0 + $0x518] sm:$0xff]
    %v193 = vld [vmem:[%s0 + $0x520] sm:$0xff]
    %v194 = vld [vmem:[%s0 + $0x528] sm:$0xff]
    %v195 = vld [vmem:[%s0 + $0x530] sm:$0xff]
    %v196 = vld [vmem:[%s0 + $0x538] sm:$0xff]
    %v197 = vld [vmem:[%s0 + $0x540] sm:$0xff]
    %v198 = vld [vmem:[%s0 + $0x548] sm:$0xff]
    %v199 = vld [vmem:[%s0 + $0x550] sm:$0xff]
    %v200 = vld [vmem:[%s0 + $0x558] sm:$0xff]
    %v201 = vld [vmem:[%s0 + $0x560] sm:$0xff]
    %v202 = vld [vmem:[%s0 + $0x568] sm:$0xff]
    %v203 = vld [vmem:[%s0 + $0x570] sm:$0xff]
    %v204 = vld [vmem:[%s0 + $0x578] sm:$0xff]
    %v205 = vld [vmem:[%s0 + $0x580] sm:$0xff]
    %v206 = vld [vmem:[%s0 + $0x588] sm:$0xff]
    %v207 = vld [vmem:[%s0 + $0x590] sm:$0xff]
    %v208 = vld [vmem:[%s0 + $0x598] sm:$0xff]
    %v209 = vld [vmem:[%s0 + $0x5a0] sm:$0xff]
    %v210 = vld [vmem:[%s0 + $0x5a8] sm:$0xff]
    %v211 = vld [vmem:[%s0 + $0x5b0] sm:$0xff]
    %v212 = vld [vmem:[%s0 + $0x5b8] sm:$0xff]
    %v213 = vld [vmem:[%s0 + $0x5c0] sm:$0xff]
    %v214 = vld [vmem:[%s0 + $0x5c8] sm:$0xff]
    %v215 = vld [vmem:[%s0 + $0x5d0] sm:$0xff]
    %v216 = vld [vmem:[%s0 + $0x5d8] sm:$0xff]
    %v217 = vld [vmem:[%s0 + $0x5e0] sm:$0xff]
    %v218 = vld [vmem:[%s0 + $0x5e8] sm:$0xff]
    %v219 = vld [vmem:[%s0 + $0x5f0] sm:$0xff]
    %v220 = vld [vmem:[%s0 + $0x5f8] sm:$0xff]
    %v221 = vld [vmem:[%s0 + $0x600] sm:$0xff]
    %v222 = vld [vmem:[%s0 + $0x608] sm:$0xff]
    %v223 = vld [vmem:[%s0 + $0x610] sm:$0xff]
    %v224 = vld [vmem:[%s0 + $0x618] sm:$0xff]
    %v225 = vld [vmem:[%s0 + $0x620] sm:$0xff]
    %v226 = vld [vmem:[%s0 + $0x628] sm:$0xff]
    %v227 = vld [vmem:[%s0 + $0x630] sm:$0xff]
    %v228 = vld [vmem:[%s0 + $0x638] sm:$0xff]
    %v229 = vld [vmem:[%s0 + $0x640] sm:$0xff]
    %v230 = vld [vmem:[%s0 + $0x648] sm:$0xff]
    %v231 = vld [vmem:[%s0 + $0x650] sm:$0xff]
    %v232 = vld [vmem:[%s0 + $0x658] sm:$0xff]
    %v233 = vld [vmem:[%s0 + $0x660] sm:$0xff]
    %v234 = vld [vmem:[%s0 + $0x668] sm:$0xff]
    %v235 = vld [vmem:[%s0 + $0x670] sm:$0xff]
    %v236 = vld [vmem:[%s0 + $0x678] sm:$0xff]
    %v237 = vld [vmem:[%s0 + $0x680] sm:$0xff]
    %v238 = vld [vmem:[%s0 + $0x688] sm:$0xff]
    %v239 = vld [vmem:[%s0 + $0x690] sm:$0xff]
    %v240 = vld [vmem:[%s0 + $0x698] sm:$0xff]
    %v241 = vld [vmem:[%s0 + $0x6a0] sm:$0xff]
    %v242 = vld [vmem:[%s0 + $0x6a8] sm:$0xff]
    %v243 = vld [vmem:[%s0 + $0x6b0] sm:$0xff]
    %v244 = vld [vmem:[%s0 + $0x6b8] sm:$0xff]
    %v245 = vld [vmem:[%s0 + $0x6c0] sm:$0xff]
    %v246 = vld [vmem:[%s0 + $0x6c8] sm:$0xff]
    %v247 = vld [vmem:[%s0 + $0x6d0] sm:$0xff]
    %v248 = vld [vmem:[%s0 + $0x6d8] sm:$0xff]
    %v249 = vld [vmem:[%s0 + $0x6e0] sm:$0xff]
    %v250 = vld [vmem:[%s0 + $0x6e8] sm:$0xff]
    %v251 = vld [vmem:[%s0 + $0x6f0] sm:$0xff]
    %v252 = vld [vmem:[%s0 + $0x6f8] sm:$0xff]
    %v253 = vld [vmem:[%s0 + $0x700] sm:$0xff]
    %v254 = vld [vmem:[%s0 + $0x708] sm:$0xff]
    %v255 = vld [vmem:[%s0 + $0x710] sm:$0xff]
    %v256 = vld [vmem:[%s0 + $0x718] sm:$0xff]
    %v257 = vld [vmem:[%s0 + $0x720] sm:$0xff]
    %v258 = vld [vmem:[%s0 + $0x728] sm:$0xff]
    %v259 = vld [vmem:[%s0 + $0x730] sm:$0xff]
    %v260 = vld [vmem:[%s0 + $0x738] sm:$0xff]
    %v261 = vld [vmem:[%s0 + $0x740] sm:$0xff]
    %v262 = vld [vmem:[%s0 + $0x748] sm:$0xff]
    %v263 = vld [vmem:[%s0 + $0x750] sm:$0xff]
    %v264 = vld [vmem:[%s0 + $0x758] sm:$0xff]
    %v265 = vld [vmem:[%s0 + $0x760] sm:$0xff]
    %v266 = vld [vmem:[%s0 + $0x768] sm:$0xff]
    %v267 = vld [vmem:[%s0 + $0x770] sm:$0xff]
    %v268 = vld [vmem:[%s0 + $0x778] sm:$0xff]
    %v269 = vld [vmem:[%s0 + $0x780] sm:$0xff]
    %v270 = vld [vmem:[%s0 + $0x788] sm:$0xff]
    %v271 = vld [vmem:[%s0 + $0x790] sm:$0xff]
    %v272 = vld [vmem:[%s0 + $0x798] sm:$0xff]
    %v273 = vld [vmem:[%s0 + $0x7a0] sm:$0xff]
    %v274 = vld [vmem:[%s0 + $0x7a8] sm:$0xff]
    %v275 = vld [vmem:[%s0 + $0x7b0] sm:$0xff]
    %v276 = vld [vmem:[%s0 + $0x7b8] sm:$0xff]
    %v277 = vld [vmem:[%s0 + $0x7c0] sm:$0xff]
    %v278 = vld [vmem:[%s0 + $0x7c8] sm:$0xff]
    %v279 = vld [vmem:[%s0 + $0x7d0] sm:$0xff]
    %v280 = vld [vmem:[%s0 + $0x7d8] sm:$0xff]
    %v281 = vld [vmem:[%s0 + $0x7e0] sm:$0xff]
    %v282 = vld [vmem:[%s0 + $0x7e8] sm:$0xff]
    %v283 = vld [vmem:[%s0 + $0x7f0] sm:$0xff]
    %v284 = vld [vmem:[%s0 + $0x7f8] sm:$0xff]
    %v285 = vld [vmem:[%s1] sm:$0xff]
    %v286 = vld [vmem:[%s1 + $0x8] sm:$0x3]
    %v287 = vld [vmem:[%s2] sm:$0xff]
    %v288 = vld [vmem:[%s2 + $0x8] sm:$0x3]
    %290 = vset.pattern.permute.xlu0 0
    %291 = vperm.xlu0 %290, %v287
    %v292 = vpop.permute.xlu0 %291
    %295 = vset.pattern.permute.xlu0 0
    %296 = vperm.xlu0 %295, %v288
    %v297 = vpop.permute.xlu0 %296
    %vm299 = vcmask 105472
    %v301 = vsel %vm299, %v285, 0
    %v304 = vsel %vm299, %v286, 0
    %v307 = vsel %vm299, %v29, 0
    %v310 = vsel %vm299, %v30, 0
    %v313 = vsel %vm299, %v31, 0
    %v316 = vsel %vm299, %v32, 0
    %v319 = vsel %vm299, %v33, 0
    %v322 = vsel %vm299, %v34, 0
    %v325 = vsel %vm299, %v35, 0
    %v328 = vsel %vm299, %v36, 0
    %v331 = vsel %vm299, %v37, 0
    %v334 = vsel %vm299, %v38, 0
    %v337 = vsel %vm299, %v39, 0
    %v340 = vsel %vm299, %v40, 0
    %v343 = vsel %vm299, %v41, 0
    %v346 = vsel %vm299, %v42, 0
    %v349 = vsel %vm299, %v43, 0
    %v352 = vsel %vm299, %v44, 0
    %v355 = vsel %vm299, %v45, 0
    %v358 = vsel %vm299, %v46, 0
    %v361 = vsel %vm299, %v47, 0
    %v364 = vsel %vm299, %v48, 0
    %v367 = vsel %vm299, %v49, 0
    %v370 = vsel %vm299, %v50, 0
    %v373 = vsel %vm299, %v51, 0
    %v376 = vsel %vm299, %v52, 0
    %v379 = vsel %vm299, %v53, 0
    %v382 = vsel %vm299, %v54, 0
    %v385 = vsel %vm299, %v55, 0
    %v388 = vsel %vm299, %v56, 0
    %v391 = vsel %vm299, %v57, 0
    %v394 = vsel %vm299, %v58, 0
    %v397 = vsel %vm299, %v59, 0
    %v400 = vsel %vm299, %v60, 0
    %v403 = vsel %vm299, %v61, 0
    %v406 = vsel %vm299, %v62, 0
    %v409 = vsel %vm299, %v63, 0
    %v412 = vsel %vm299, %v64, 0
    %v415 = vsel %vm299, %v65, 0
    %v418 = vsel %vm299, %v66, 0
    %v421 = vsel %vm299, %v67, 0
    %v424 = vsel %vm299, %v68, 0
    %v427 = vsel %vm299, %v69, 0
    %v430 = vsel %vm299, %v70, 0
    %v433 = vsel %vm299, %v71, 0
    %v436 = vsel %vm299, %v72, 0
    %v439 = vsel %vm299, %v73, 0
    %v442 = vsel %vm299, %v74, 0
    %v445 = vsel %vm299, %v75, 0
    %v448 = vsel %vm299, %v76, 0
    %v451 = vsel %vm299, %v77, 0
    %v454 = vsel %vm299, %v78, 0
    %v457 = vsel %vm299, %v79, 0
    %v460 = vsel %vm299, %v80, 0
    %v463 = vsel %vm299, %v81, 0
    %v466 = vsel %vm299, %v82, 0
    %v469 = vsel %vm299, %v83, 0
    %v472 = vsel %vm299, %v84, 0
    %v475 = vsel %vm299, %v85, 0
    %v478 = vsel %vm299, %v86, 0
    %v481 = vsel %vm299, %v87, 0
    %v484 = vsel %vm299, %v88, 0
    %v487 = vsel %vm299, %v89, 0
    %v490 = vsel %vm299, %v90, 0
    %v493 = vsel %vm299, %v91, 0
    %v496 = vsel %vm299, %v92, 0
    %v499 = vsel %vm299, %v93, 0
    %v502 = vsel %vm299, %v94, 0
    %v505 = vsel %vm299, %v95, 0
    %v508 = vsel %vm299, %v96, 0
    %v511 = vsel %vm299, %v97, 0
    %v514 = vsel %vm299, %v98, 0
    %v517 = vsel %vm299, %v99, 0
    %v520 = vsel %vm299, %v100, 0
    %v523 = vsel %vm299, %v101, 0
    %v526 = vsel %vm299, %v102, 0
    %v529 = vsel %vm299, %v103, 0
    %v532 = vsel %vm299, %v104, 0
    %v535 = vsel %vm299, %v105, 0
    %v538 = vsel %vm299, %v106, 0
    %v541 = vsel %vm299, %v107, 0
    %v544 = vsel %vm299, %v108, 0
    %v547 = vsel %vm299, %v109, 0
    %v550 = vsel %vm299, %v110, 0
    %v553 = vsel %vm299, %v111, 0
    %v556 = vsel %vm299, %v112, 0
    %v559 = vsel %vm299, %v113, 0
    %v562 = vsel %vm299, %v114, 0
    %v565 = vsel %vm299, %v115, 0
    %v568 = vsel %vm299, %v116, 0
    %v571 = vsel %vm299, %v117, 0
    %v574 = vsel %vm299, %v118, 0
    %v577 = vsel %vm299, %v119, 0
    %v580 = vsel %vm299, %v120, 0
    %v583 = vsel %vm299, %v121, 0
    %v586 = vsel %vm299, %v122, 0
    %v589 = vsel %vm299, %v123, 0
    %v592 = vsel %vm299, %v124, 0
    %v595 = vsel %vm299, %v125, 0
    %v598 = vsel %vm299, %v126, 0
    %v601 = vsel %vm299, %v127, 0
    %v604 = vsel %vm299, %v128, 0
    %v607 = vsel %vm299, %v129, 0
    %v610 = vsel %vm299, %v130, 0
    %v613 = vsel %vm299, %v131, 0
    %v616 = vsel %vm299, %v132, 0
    %v619 = vsel %vm299, %v133, 0
    %v622 = vsel %vm299, %v134, 0
    %v625 = vsel %vm299, %v135, 0
    %v628 = vsel %vm299, %v136, 0
    %v631 = vsel %vm299, %v137, 0
    %v634 = vsel %vm299, %v138, 0
    %v637 = vsel %vm299, %v139, 0
    %v640 = vsel %vm299, %v140, 0
    %v643 = vsel %vm299, %v141, 0
    %v646 = vsel %vm299, %v142, 0
    %v649 = vsel %vm299, %v143, 0
    %v652 = vsel %vm299, %v144, 0
    %v655 = vsel %vm299, %v145, 0
    %v658 = vsel %vm299, %v146, 0
    %v661 = vsel %vm299, %v147, 0
    %v664 = vsel %vm299, %v148, 0
    %v667 = vsel %vm299, %v149, 0
    %v670 = vsel %vm299, %v150, 0
    %v673 = vsel %vm299, %v151, 0
    %v676 = vsel %vm299, %v152, 0
    %v679 = vsel %vm299, %v153, 0
    %v682 = vsel %vm299, %v154, 0
    %v685 = vsel %vm299, %v155, 0
    %v688 = vsel %vm299, %v156, 0
    %v691 = vsel %vm299, %v157, 0
    %v694 = vsel %vm299, %v158, 0
    %v697 = vsel %vm299, %v159, 0
    %v700 = vsel %vm299, %v160, 0
    %v703 = vsel %vm299, %v161, 0
    %v706 = vsel %vm299, %v162, 0
    %v709 = vsel %vm299, %v163, 0
    %v712 = vsel %vm299, %v164, 0
    %v715 = vsel %vm299, %v165, 0
    %v718 = vsel %vm299, %v166, 0
    %v721 = vsel %vm299, %v167, 0
    %v724 = vsel %vm299, %v168, 0
    %v727 = vsel %vm299, %v169, 0
    %v730 = vsel %vm299, %v170, 0
    %v733 = vsel %vm299, %v171, 0
    %v736 = vsel %vm299, %v172, 0
    %v739 = vsel %vm299, %v173, 0
    %v742 = vsel %vm299, %v174, 0
    %v745 = vsel %vm299, %v175, 0
    %v748 = vsel %vm299, %v176, 0
    %v751 = vsel %vm299, %v177, 0
    %v754 = vsel %vm299, %v178, 0
    %v757 = vsel %vm299, %v179, 0
    %v760 = vsel %vm299, %v180, 0
    %v763 = vsel %vm299, %v181, 0
    %v766 = vsel %vm299, %v182, 0
    %v769 = vsel %vm299, %v183, 0
    %v772 = vsel %vm299, %v184, 0
    %v775 = vsel %vm299, %v185, 0
    %v778 = vsel %vm299, %v186, 0
    %v781 = vsel %vm299, %v187, 0
    %v784 = vsel %vm299, %v188, 0
    %v787 = vsel %vm299, %v189, 0
    %v790 = vsel %vm299, %v190, 0
    %v793 = vsel %vm299, %v191, 0
    %v796 = vsel %vm299, %v192, 0
    %v799 = vsel %vm299, %v193, 0
    %v802 = vsel %vm299, %v194, 0
    %v805 = vsel %vm299, %v195, 0
    %v808 = vsel %vm299, %v196, 0
    %v811 = vsel %vm299, %v197, 0
    %v814 = vsel %vm299, %v198, 0
    %v817 = vsel %vm299, %v199, 0
    %v820 = vsel %vm299, %v200, 0
    %v823 = vsel %vm299, %v201, 0
    %v826 = vsel %vm299, %v202, 0
    %v829 = vsel %vm299, %v203, 0
    %v832 = vsel %vm299, %v204, 0
    %v835 = vsel %vm299, %v205, 0
    %v838 = vsel %vm299, %v206, 0
    %v841 = vsel %vm299, %v207, 0
    %v844 = vsel %vm299, %v208, 0
    %v847 = vsel %vm299, %v209, 0
    %v850 = vsel %vm299, %v210, 0
    %v853 = vsel %vm299, %v211, 0
    %v856 = vsel %vm299, %v212, 0
    %v859 = vsel %vm299, %v213, 0
    %v862 = vsel %vm299, %v214, 0
    %v865 = vsel %vm299, %v215, 0
    %v868 = vsel %vm299, %v216, 0
    %v871 = vsel %vm299, %v217, 0
    %v874 = vsel %vm299, %v218, 0
    %v877 = vsel %vm299, %v219, 0
    %v880 = vsel %vm299, %v220, 0
    %v883 = vsel %vm299, %v221, 0
    %v886 = vsel %vm299, %v222, 0
    %v889 = vsel %vm299, %v223, 0
    %v892 = vsel %vm299, %v224, 0
    %v895 = vsel %vm299, %v225, 0
    %v898 = vsel %vm299, %v226, 0
    %v901 = vsel %vm299, %v227, 0
    %v904 = vsel %vm299, %v228, 0
    %v907 = vsel %vm299, %v229, 0
    %v910 = vsel %vm299, %v230, 0
    %v913 = vsel %vm299, %v231, 0
    %v916 = vsel %vm299, %v232, 0
    %v919 = vsel %vm299, %v233, 0
    %v922 = vsel %vm299, %v234, 0
    %v925 = vsel %vm299, %v235, 0
    %v928 = vsel %vm299, %v236, 0
    %v931 = vsel %vm299, %v237, 0
    %v934 = vsel %vm299, %v238, 0
    %v937 = vsel %vm299, %v239, 0
    %v940 = vsel %vm299, %v240, 0
    %v943 = vsel %vm299, %v241, 0
    %v946 = vsel %vm299, %v242, 0
    %v949 = vsel %vm299, %v243, 0
    %v952 = vsel %vm299, %v244, 0
    %v955 = vsel %vm299, %v245, 0
    %v958 = vsel %vm299, %v246, 0
    %v961 = vsel %vm299, %v247, 0
    %v964 = vsel %vm299, %v248, 0
    %v967 = vsel %vm299, %v249, 0
    %v970 = vsel %vm299, %v250, 0
    %v973 = vsel %vm299, %v251, 0
    %v976 = vsel %vm299, %v252, 0
    %v979 = vsel %vm299, %v253, 0
    %v982 = vsel %vm299, %v254, 0
    %v985 = vsel %vm299, %v255, 0
    %v988 = vsel %vm299, %v256, 0
    %v991 = vsel %vm299, %v257, 0
    %v994 = vsel %vm299, %v258, 0
    %v997 = vsel %vm299, %v259, 0
    %v1000 = vsel %vm299, %v260, 0
    %v1003 = vsel %vm299, %v261, 0
    %v1006 = vsel %vm299, %v262, 0
    %v1009 = vsel %vm299, %v263, 0
    %v1012 = vsel %vm299, %v264, 0
    %v1015 = vsel %vm299, %v265, 0
    %v1018 = vsel %vm299, %v266, 0
    %v1021 = vsel %vm299, %v267, 0
    %v1024 = vsel %vm299, %v268, 0
    %v1027 = vsel %vm299, %v269, 0
    %v1030 = vsel %vm299, %v270, 0
    %v1033 = vsel %vm299, %v271, 0
    %v1036 = vsel %vm299, %v272, 0
    %v1039 = vsel %vm299, %v273, 0
    %v1042 = vsel %vm299, %v274, 0
    %v1045 = vsel %vm299, %v275, 0
    %v1048 = vsel %vm299, %v276, 0
    %v1051 = vsel %vm299, %v277, 0
    %v1054 = vsel %vm299, %v278, 0
    %v1057 = vsel %vm299, %v279, 0
    %v1060 = vsel %vm299, %v280, 0
    %v1063 = vsel %vm299, %v281, 0
    %v1066 = vsel %vm299, %v282, 0
    %v1069 = vsel %vm299, %v283, 0
    %v1072 = vsel %vm299, %v284, 0
    %1074 = vmatprep.subr.mxu0 0.0
    %1075 = vmatpush1.xpose.msra.mxu0 %v307
    %1076 = vmatprep.subr.mxu0 0.0
    %1077 = vmatpush1.xpose.msra.mxu0 %v310
    %1078 = vmatprep.subr.mxu0 0.0
    %1079 = vmatpush1.xpose.msra.mxu0 %v313
    %1080 = vmatprep.subr.mxu0 0.0
    %1081 = vmatpush1.xpose.msra.mxu0 %v316
    %1082 = vmatprep.subr.mxu0 0.0
    %1083 = vmatpush1.xpose.msra.mxu0 %v319
    %1084 = vmatprep.subr.mxu0 0.0
    %1085 = vmatpush1.xpose.msra.mxu0 %v322
    %1086 = vmatprep.subr.mxu0 0.0
    %1087 = vmatpush1.xpose.msra.mxu0 %v325
    %1088 = vmatprep.subr.mxu0 0.0
    %1089 = vmatpush1.xpose.msra.mxu0 %v328
    %1090 = vmatprep.subr.mxu0 0.0
    %1091 = vmatpush1.xpose.msra.mxu0 %v331
    %1092 = vmatprep.subr.mxu0 0.0
    %1093 = vmatpush1.xpose.msra.mxu0 %v334
    %1094 = vmatprep.subr.mxu0 0.0
    %1095 = vmatpush1.xpose.msra.mxu0 %v337
    %1096 = vmatprep.subr.mxu0 0.0
    %1097 = vmatpush1.xpose.msra.mxu0 %v340
    %1098 = vmatprep.subr.mxu0 0.0
    %1099 = vmatpush1.xpose.msra.mxu0 %v343
    %1100 = vmatprep.subr.mxu0 0.0
    %1101 = vmatpush1.xpose.msra.mxu0 %v346
    %1102 = vmatprep.subr.mxu0 0.0
    %1103 = vmatpush1.xpose.msra.mxu0 %v349
    %1104 = vmatprep.subr.mxu0 0.0
    %1105 = vmatpush1.xpose.msra.mxu0 %v352
    %1106 = vmatprep.subr.mxu0 0.0
    %1107 = vmatpush1.xpose.msra.mxu0 %v355
    %1108 = vmatprep.subr.mxu0 0.0
    %1109 = vmatpush1.xpose.msra.mxu0 %v358
    %1110 = vmatprep.subr.mxu0 0.0
    %1111 = vmatpush1.xpose.msra.mxu0 %v361
    %1112 = vmatprep.subr.mxu0 0.0
    %1113 = vmatpush1.xpose.msra.mxu0 %v364
    %1114 = vmatprep.subr.mxu0 0.0
    %1115 = vmatpush1.xpose.msra.mxu0 %v367
    %1116 = vmatprep.subr.mxu0 0.0
    %1117 = vmatpush1.xpose.msra.mxu0 %v370
    %1118 = vmatprep.subr.mxu0 0.0
    %1119 = vmatpush1.xpose.msra.mxu0 %v373
    %1120 = vmatprep.subr.mxu0 0.0
    %1121 = vmatpush1.xpose.msra.mxu0 %v376
    %1122 = vmatprep.subr.mxu0 0.0
    %1123 = vmatpush1.xpose.msra.mxu0 %v379
    %1124 = vmatprep.subr.mxu0 0.0
    %1125 = vmatpush1.xpose.msra.mxu0 %v382
    %1126 = vmatprep.subr.mxu0 0.0
    %1127 = vmatpush1.xpose.msra.mxu0 %v385
    %1128 = vmatprep.subr.mxu0 0.0
    %1129 = vmatpush1.xpose.msra.mxu0 %v388
    %1130 = vmatprep.subr.mxu0 0.0
    %1131 = vmatpush1.xpose.msra.mxu0 %v391
    %1132 = vmatprep.subr.mxu0 0.0
    %1133 = vmatpush1.xpose.msra.mxu0 %v394
    %1134 = vmatprep.subr.mxu0 0.0
    %1135 = vmatpush1.xpose.msra.mxu0 %v397
    %1136 = vmatprep.subr.mxu0 0.0
    %1137 = vmatpush1.xpose.msra.mxu0 %v400
    %1138 = vmatprep.mubr.f32.mxu0 0.0
    %1139 = vmatmul.mubr.f32.gmra.mrb[0].mxu0 %v301
    %v1140 = vpop.f32.mrb[0].mxu0
    %v1141 = vadd.f32 %v292, %v1140
    %v1142 = vpop.f32.mrb[0].mxu0
    %v1143 = vadd.f32 %v292, %v1142
    %1144 = vmatprep.mubr.f32.mxu0 0.0
    %1145 = vmatmul.mubr.f32.gmra.mrb[0].mxu0 %v304
    %v1146 = vpop.f32.mrb[0].mxu0
    %v1147 = vadd.f32 %v297, %v1146
    %v1148 = vpop.f32.mrb[0].mxu0
    %v1149 = vadd.f32 %v297, %v1148
    %1150 = vdwg.mxu0
    %1151 = vmatprep.subr.mxu0 0.0
    %1152 = vmatpush1.xpose.msra.mxu0 %v403
    %1153 = vmatprep.subr.mxu0 0.0
    %1154 = vmatpush1.xpose.msra.mxu0 %v406
    %1155 = vmatprep.subr.mxu0 0.0
    %1156 = vmatpush1.xpose.msra.mxu0 %v409
    %1157 = vmatprep.subr.mxu0 0.0
    %1158 = vmatpush1.xpose.msra.mxu0 %v412
    %1159 = vmatprep.subr.mxu0 0.0
    %1160 = vmatpush1.xpose.msra.mxu0 %v415
    %1161 = vmatprep.subr.mxu0 0.0
    %1162 = vmatpush1.xpose.msra.mxu0 %v418
    %1163 = vmatprep.subr.mxu0 0.0
    %1164 = vmatpush1.xpose.msra.mxu0 %v421
    %1165 = vmatprep.subr.mxu0 0.0
    %1166 = vmatpush1.xpose.msra.mxu0 %v424
    %1167 = vmatprep.subr.mxu0 0.0
    %1168 = vmatpush1.xpose.msra.mxu0 %v427
    %1169 = vmatprep.subr.mxu0 0.0
    %1170 = vmatpush1.xpose.msra.mxu0 %v430
    %1171 = vmatprep.subr.mxu0 0.0
    %1172 = vmatpush1.xpose.msra.mxu0 %v433
    %1173 = vmatprep.subr.mxu0 0.0
    %1174 = vmatpush1.xpose.msra.mxu0 %v436
    %1175 = vmatprep.subr.mxu0 0.0
    %1176 = vmatpush1.xpose.msra.mxu0 %v439
    %1177 = vmatprep.subr.mxu0 0.0
    %1178 = vmatpush1.xpose.msra.mxu0 %v442
    %1179 = vmatprep.subr.mxu0 0.0
    %1180 = vmatpush1.xpose.msra.mxu0 %v445
    %1181 = vmatprep.subr.mxu0 0.0
    %1182 = vmatpush1.xpose.msra.mxu0 %v448
    %1183 = vmatprep.subr.mxu0 0.0
    %1184 = vmatpush1.xpose.msra.mxu0 %v451
    %1185 = vmatprep.subr.mxu0 0.0
    %1186 = vmatpush1.xpose.msra.mxu0 %v454
    %1187 = vmatprep.subr.mxu0 0.0
    %1188 = vmatpush1.xpose.msra.mxu0 %v457
    %1189 = vmatprep.subr.mxu0 0.0
    %1190 = vmatpush1.xpose.msra.mxu0 %v460
    %1191 = vmatprep.subr.mxu0 0.0
    %1192 = vmatpush1.xpose.msra.mxu0 %v463
    %1193 = vmatprep.subr.mxu0 0.0
    %1194 = vmatpush1.xpose.msra.mxu0 %v466
    %1195 = vmatprep.subr.mxu0 0.0
    %1196 = vmatpush1.xpose.msra.mxu0 %v469
    %1197 = vmatprep.subr.mxu0 0.0
    %1198 = vmatpush1.xpose.msra.mxu0 %v472
    %1199 = vmatprep.subr.mxu0 0.0
    %1200 = vmatpush1.xpose.msra.mxu0 %v475
    %1201 = vmatprep.subr.mxu0 0.0
    %1202 = vmatpush1.xpose.msra.mxu0 %v478
    %1203 = vmatprep.subr.mxu0 0.0
    %1204 = vmatpush1.xpose.msra.mxu0 %v481
    %1205 = vmatprep.subr.mxu0 0.0
    %1206 = vmatpush1.xpose.msra.mxu0 %v484
    %1207 = vmatprep.subr.mxu0 0.0
    %1208 = vmatpush1.xpose.msra.mxu0 %v487
    %1209 = vmatprep.subr.mxu0 0.0
    %1210 = vmatpush1.xpose.msra.mxu0 %v490
    %1211 = vmatprep.subr.mxu0 0.0
    %1212 = vmatpush1.xpose.msra.mxu0 %v493
    %1213 = vmatprep.subr.mxu0 0.0
    %1214 = vmatpush1.xpose.msra.mxu0 %v496
    %1215 = vmatprep.mubr.f32.mxu0 0.0
    %1216 = vmatmul.mubr.f32.gmra.mrb[0].mxu0 %v301
    %v1217 = vpop.f32.mrb[0].mxu0
    %v1218 = vadd.f32 %v292, %v1217
    %v1219 = vpop.f32.mrb[0].mxu0
    %v1220 = vadd.f32 %v292, %v1219
    %1221 = vmatprep.mubr.f32.mxu0 0.0
    %1222 = vmatmul.mubr.f32.gmra.mrb[0].mxu0 %v304
    %v1223 = vpop.f32.mrb[0].mxu0
    %v1224 = vadd.f32 %v297, %v1223
    %v1225 = vpop.f32.mrb[0].mxu0
    %v1226 = vadd.f32 %v297, %v1225
    %1227 = vdwg.mxu0
    %1228 = vmatprep.subr.mxu0 0.0
    %1229 = vmatpush1.xpose.msra.mxu0 %v499
    %1230 = vmatprep.subr.mxu0 0.0
    %1231 = vmatpush1.xpose.msra.mxu0 %v502
    %1232 = vmatprep.subr.mxu0 0.0
    %1233 = vmatpush1.xpose.msra.mxu0 %v505
    %1234 = vmatprep.subr.mxu0 0.0
    %1235 = vmatpush1.xpose.msra.mxu0 %v508
    %1236 = vmatprep.subr.mxu0 0.0
    %1237 = vmatpush1.xpose.msra.mxu0 %v511
    %1238 = vmatprep.subr.mxu0 0.0
    %1239 = vmatpush1.xpose.msra.mxu0 %v514
    %1240 = vmatprep.subr.mxu0 0.0
    %1241 = vmatpush1.xpose.msra.mxu0 %v517
    %1242 = vmatprep.subr.mxu0 0.0
    %1243 = vmatpush1.xpose.msra.mxu0 %v520
    %1244 = vmatprep.subr.mxu0 0.0
    %1245 = vmatpush1.xpose.msra.mxu0 %v523
    %1246 = vmatprep.subr.mxu0 0.0
    %1247 = vmatpush1.xpose.msra.mxu0 %v526
    %1248 = vmatprep.subr.mxu0 0.0
    %1249 = vmatpush1.xpose.msra.mxu0 %v529
    %1250 = vmatprep.subr.mxu0 0.0
    %1251 = vmatpush1.xpose.msra.mxu0 %v532
    %1252 = vmatprep.subr.mxu0 0.0
    %1253 = vmatpush1.xpose.msra.mxu0 %v535
    %1254 = vmatprep.subr.mxu0 0.0
    %1255 = vmatpush1.xpose.msra.mxu0 %v538
    %1256 = vmatprep.subr.mxu0 0.0
    %1257 = vmatpush1.xpose.msra.mxu0 %v541
    %1258 = vmatprep.subr.mxu0 0.0
    %1259 = vmatpush1.xpose.msra.mxu0 %v544
    %1260 = vmatprep.subr.mxu0 0.0
    %1261 = vmatpush1.xpose.msra.mxu0 %v547
    %1262 = vmatprep.subr.mxu0 0.0
    %1263 = vmatpush1.xpose.msra.mxu0 %v550
    %1264 = vmatprep.subr.mxu0 0.0
    %1265 = vmatpush1.xpose.msra.mxu0 %v553
    %1266 = vmatprep.subr.mxu0 0.0
    %1267 = vmatpush1.xpose.msra.mxu0 %v556
    %1268 = vmatprep.subr.mxu0 0.0
    %1269 = vmatpush1.xpose.msra.mxu0 %v559
    %1270 = vmatprep.subr.mxu0 0.0
    %1271 = vmatpush1.xpose.msra.mxu0 %v562
    %1272 = vmatprep.subr.mxu0 0.0
    %1273 = vmatpush1.xpose.msra.mxu0 %v565
    %1274 = vmatprep.subr.mxu0 0.0
    %1275 = vmatpush1.xpose.msra.mxu0 %v568
    %1276 = vmatprep.subr.mxu0 0.0
    %1277 = vmatpush1.xpose.msra.mxu0 %v571
    %1278 = vmatprep.subr.mxu0 0.0
    %1279 = vmatpush1.xpose.msra.mxu0 %v574
    %1280 = vmatprep.subr.mxu0 0.0
    %1281 = vmatpush1.xpose.msra.mxu0 %v577
    %1282 = vmatprep.subr.mxu0 0.0
    %1283 = vmatpush1.xpose.msra.mxu0 %v580
    %1284 = vmatprep.subr.mxu0 0.0
    %1285 = vmatpush1.xpose.msra.mxu0 %v583
    %1286 = vmatprep.subr.mxu0 0.0
    %1287 = vmatpush1.xpose.msra.mxu0 %v586
    %1288 = vmatprep.subr.mxu0 0.0
    %1289 = vmatpush1.xpose.msra.mxu0 %v589
    %1290 = vmatprep.subr.mxu0 0.0
    %1291 = vmatpush1.xpose.msra.mxu0 %v592
    %1292 = vmatprep.mubr.f32.mxu0 0.0
    %1293 = vmatmul.mubr.f32.gmra.mrb[0].mxu0 %v301
    %v1294 = vpop.f32.mrb[0].mxu0
    %v1295 = vadd.f32 %v292, %v1294
    %v1296 = vpop.f32.mrb[0].mxu0
    %v1297 = vadd.f32 %v292, %v1296
    %1298 = vmatprep.mubr.f32.mxu0 0.0
    %1299 = vmatmul.mubr.f32.gmra.mrb[0].mxu0 %v304
    %v1300 = vpop.f32.mrb[0].mxu0
    %v1301 = vadd.f32 %v297, %v1300
    %v1302 = vpop.f32.mrb[0].mxu0
    %v1303 = vadd.f32 %v297, %v1302
    %1304 = vdwg.mxu0
    %1305 = vmatprep.subr.mxu0 0.0
    %1306 = vmatpush1.xpose.msra.mxu0 %v595
    %1307 = vmatprep.subr.mxu0 0.0
    %1308 = vmatpush1.xpose.msra.mxu0 %v598
    %1309 = vmatprep.subr.mxu0 0.0
    %1310 = vmatpush1.xpose.msra.mxu0 %v601
    %1311 = vmatprep.subr.mxu0 0.0
    %1312 = vmatpush1.xpose.msra.mxu0 %v604
    %1313 = vmatprep.subr.mxu0 0.0
    %1314 = vmatpush1.xpose.msra.mxu0 %v607
    %1315 = vmatprep.subr.mxu0 0.0
    %1316 = vmatpush1.xpose.msra.mxu0 %v610
    %1317 = vmatprep.subr.mxu0 0.0
    %1318 = vmatpush1.xpose.msra.mxu0 %v613
    %1319 = vmatprep.subr.mxu0 0.0
    %1320 = vmatpush1.xpose.msra.mxu0 %v616
    %1321 = vmatprep.subr.mxu0 0.0
    %1322 = vmatpush1.xpose.msra.mxu0 %v619
    %1323 = vmatprep.subr.mxu0 0.0
    %1324 = vmatpush1.xpose.msra.mxu0 %v622
    %1325 = vmatprep.subr.mxu0 0.0
    %1326 = vmatpush1.xpose.msra.mxu0 %v625
    %1327 = vmatprep.subr.mxu0 0.0
    %1328 = vmatpush1.xpose.msra.mxu0 %v628
    %1329 = vmatprep.subr.mxu0 0.0
    %1330 = vmatpush1.xpose.msra.mxu0 %v631
    %1331 = vmatprep.subr.mxu0 0.0
    %1332 = vmatpush1.xpose.msra.mxu0 %v634
    %1333 = vmatprep.subr.mxu0 0.0
    %1334 = vmatpush1.xpose.msra.mxu0 %v637
    %1335 = vmatprep.subr.mxu0 0.0
    %1336 = vmatpush1.xpose.msra.mxu0 %v640
    %1337 = vmatprep.subr.mxu0 0.0
    %1338 = vmatpush1.xpose.msra.mxu0 %v643
    %1339 = vmatprep.subr.mxu0 0.0
    %1340 = vmatpush1.xpose.msra.mxu0 %v646
    %1341 = vmatprep.subr.mxu0 0.0
    %1342 = vmatpush1.xpose.msra.mxu0 %v649
    %1343 = vmatprep.subr.mxu0 0.0
    %1344 = vmatpush1.xpose.msra.mxu0 %v652
    %1345 = vmatprep.subr.mxu0 0.0
    %1346 = vmatpush1.xpose.msra.mxu0 %v655
    %1347 = vmatprep.subr.mxu0 0.0
    %1348 = vmatpush1.xpose.msra.mxu0 %v658
    %1349 = vmatprep.subr.mxu0 0.0
    %1350 = vmatpush1.xpose.msra.mxu0 %v661
    %1351 = vmatprep.subr.mxu0 0.0
    %1352 = vmatpush1.xpose.msra.mxu0 %v664
    %1353 = vmatprep.subr.mxu0 0.0
    %1354 = vmatpush1.xpose.msra.mxu0 %v667
    %1355 = vmatprep.subr.mxu0 0.0
    %1356 = vmatpush1.xpose.msra.mxu0 %v670
    %1357 = vmatprep.subr.mxu0 0.0
    %1358 = vmatpush1.xpose.msra.mxu0 %v673
    %1359 = vmatprep.subr.mxu0 0.0
    %1360 = vmatpush1.xpose.msra.mxu0 %v676
    %1361 = vmatprep.subr.mxu0 0.0
    %1362 = vmatpush1.xpose.msra.mxu0 %v679
    %1363 = vmatprep.subr.mxu0 0.0
    %1364 = vmatpush1.xpose.msra.mxu0 %v682
    %1365 = vmatprep.subr.mxu0 0.0
    %1366 = vmatpush1.xpose.msra.mxu0 %v685
    %1367 = vmatprep.subr.mxu0 0.0
    %1368 = vmatpush1.xpose.msra.mxu0 %v688
    %1369 = vmatprep.mubr.f32.mxu0 0.0
    %1370 = vmatmul.mubr.f32.gmra.mrb[0].mxu0 %v301
    %v1371 = vpop.f32.mrb[0].mxu0
    %v1372 = vadd.f32 %v292, %v1371
    %v1373 = vpop.f32.mrb[0].mxu0
    %v1374 = vadd.f32 %v292, %v1373
    %1375 = vmatprep.mubr.f32.mxu0 0.0
    %1376 = vmatmul.mubr.f32.gmra.mrb[0].mxu0 %v304
    %v1377 = vpop.f32.mrb[0].mxu0
    %v1378 = vadd.f32 %v297, %v1377
    %v1379 = vpop.f32.mrb[0].mxu0
    %v1380 = vadd.f32 %v297, %v1379
    %1381 = vdwg.mxu0
    %1382 = vmatprep.subr.mxu0 0.0
    %1383 = vmatpush1.xpose.msra.mxu0 %v691
    %1384 = vmatprep.subr.mxu0 0.0
    %1385 = vmatpush1.xpose.msra.mxu0 %v694
    %1386 = vmatprep.subr.mxu0 0.0
    %1387 = vmatpush1.xpose.msra.mxu0 %v697
    %1388 = vmatprep.subr.mxu0 0.0
    %1389 = vmatpush1.xpose.msra.mxu0 %v700
    %1390 = vmatprep.subr.mxu0 0.0
    %1391 = vmatpush1.xpose.msra.mxu0 %v703
    %1392 = vmatprep.subr.mxu0 0.0
    %1393 = vmatpush1.xpose.msra.mxu0 %v706
    %1394 = vmatprep.subr.mxu0 0.0
    %1395 = vmatpush1.xpose.msra.mxu0 %v709
    %1396 = vmatprep.subr.mxu0 0.0
    %1397 = vmatpush1.xpose.msra.mxu0 %v712
    %1398 = vmatprep.subr.mxu0 0.0
    %1399 = vmatpush1.xpose.msra.mxu0 %v715
    %1400 = vmatprep.subr.mxu0 0.0
    %1401 = vmatpush1.xpose.msra.mxu0 %v718
    %1402 = vmatprep.subr.mxu0 0.0
    %1403 = vmatpush1.xpose.msra.mxu0 %v721
    %1404 = vmatprep.subr.mxu0 0.0
    %1405 = vmatpush1.xpose.msra.mxu0 %v724
    %1406 = vmatprep.subr.mxu0 0.0
    %1407 = vmatpush1.xpose.msra.mxu0 %v727
    %1408 = vmatprep.subr.mxu0 0.0
    %1409 = vmatpush1.xpose.msra.mxu0 %v730
    %1410 = vmatprep.subr.mxu0 0.0
    %1411 = vmatpush1.xpose.msra.mxu0 %v733
    %1412 = vmatprep.subr.mxu0 0.0
    %1413 = vmatpush1.xpose.msra.mxu0 %v736
    %1414 = vmatprep.subr.mxu0 0.0
    %1415 = vmatpush1.xpose.msra.mxu0 %v739
    %1416 = vmatprep.subr.mxu0 0.0
    %1417 = vmatpush1.xpose.msra.mxu0 %v742
    %1418 = vmatprep.subr.mxu0 0.0
    %1419 = vmatpush1.xpose.msra.mxu0 %v745
    %1420 = vmatprep.subr.mxu0 0.0
    %1421 = vmatpush1.xpose.msra.mxu0 %v748
    %1422 = vmatprep.subr.mxu0 0.0
    %1423 = vmatpush1.xpose.msra.mxu0 %v751
    %1424 = vmatprep.subr.mxu0 0.0
    %1425 = vmatpush1.xpose.msra.mxu0 %v754
    %1426 = vmatprep.subr.mxu0 0.0
    %1427 = vmatpush1.xpose.msra.mxu0 %v757
    %1428 = vmatprep.subr.mxu0 0.0
    %1429 = vmatpush1.xpose.msra.mxu0 %v760
    %1430 = vmatprep.subr.mxu0 0.0
    %1431 = vmatpush1.xpose.msra.mxu0 %v763
    %1432 = vmatprep.subr.mxu0 0.0
    %1433 = vmatpush1.xpose.msra.mxu0 %v766
    %1434 = vmatprep.subr.mxu0 0.0
    %1435 = vmatpush1.xpose.msra.mxu0 %v769
    %1436 = vmatprep.subr.mxu0 0.0
    %1437 = vmatpush1.xpose.msra.mxu0 %v772
    %1438 = vmatprep.subr.mxu0 0.0
    %1439 = vmatpush1.xpose.msra.mxu0 %v775
    %1440 = vmatprep.subr.mxu0 0.0
    %1441 = vmatpush1.xpose.msra.mxu0 %v778
    %1442 = vmatprep.subr.mxu0 0.0
    %1443 = vmatpush1.xpose.msra.mxu0 %v781
    %1444 = vmatprep.subr.mxu0 0.0
    %1445 = vmatpush1.xpose.msra.mxu0 %v784
    %1446 = vmatprep.mubr.f32.mxu0 0.0
    %1447 = vmatmul.mubr.f32.gmra.mrb[0].mxu0 %v301
    %v1448 = vpop.f32.mrb[0].mxu0
    %v1449 = vadd.f32 %v292, %v1448
    %v1450 = vpop.f32.mrb[0].mxu0
    %v1451 = vadd.f32 %v292, %v1450
    %1452 = vmatprep.mubr.f32.mxu0 0.0
    %1453 = vmatmul.mubr.f32.gmra.mrb[0].mxu0 %v304
    %v1454 = vpop.f32.mrb[0].mxu0
    %v1455 = vadd.f32 %v297, %v1454
    %v1456 = vpop.f32.mrb[0].mxu0
    %v1457 = vadd.f32 %v297, %v1456
    %1458 = vdwg.mxu0
    %1459 = vmatprep.subr.mxu0 0.0
    %1460 = vmatpush1.xpose.msra.mxu0 %v787
    %1461 = vmatprep.subr.mxu0 0.0
    %1462 = vmatpush1.xpose.msra.mxu0 %v790
    %1463 = vmatprep.subr.mxu0 0.0
    %1464 = vmatpush1.xpose.msra.mxu0 %v793
    %1465 = vmatprep.subr.mxu0 0.0
    %1466 = vmatpush1.xpose.msra.mxu0 %v796
    %1467 = vmatprep.subr.mxu0 0.0
    %1468 = vmatpush1.xpose.msra.mxu0 %v799
    %1469 = vmatprep.subr.mxu0 0.0
    %1470 = vmatpush1.xpose.msra.mxu0 %v802
    %1471 = vmatprep.subr.mxu0 0.0
    %1472 = vmatpush1.xpose.msra.mxu0 %v805
    %1473 = vmatprep.subr.mxu0 0.0
    %1474 = vmatpush1.xpose.msra.mxu0 %v808
    %1475 = vmatprep.subr.mxu0 0.0
    %1476 = vmatpush1.xpose.msra.mxu0 %v811
    %1477 = vmatprep.subr.mxu0 0.0
    %1478 = vmatpush1.xpose.msra.mxu0 %v814
    %1479 = vmatprep.subr.mxu0 0.0
    %1480 = vmatpush1.xpose.msra.mxu0 %v817
    %1481 = vmatprep.subr.mxu0 0.0
    %1482 = vmatpush1.xpose.msra.mxu0 %v820
    %1483 = vmatprep.subr.mxu0 0.0
    %1484 = vmatpush1.xpose.msra.mxu0 %v823
    %1485 = vmatprep.subr.mxu0 0.0
    %1486 = vmatpush1.xpose.msra.mxu0 %v826
    %1487 = vmatprep.subr.mxu0 0.0
    %1488 = vmatpush1.xpose.msra.mxu0 %v829
    %1489 = vmatprep.subr.mxu0 0.0
    %1490 = vmatpush1.xpose.msra.mxu0 %v832
    %1491 = vmatprep.subr.mxu0 0.0
    %1492 = vmatpush1.xpose.msra.mxu0 %v835
    %1493 = vmatprep.subr.mxu0 0.0
    %1494 = vmatpush1.xpose.msra.mxu0 %v838
    %1495 = vmatprep.subr.mxu0 0.0
    %1496 = vmatpush1.xpose.msra.mxu0 %v841
    %1497 = vmatprep.subr.mxu0 0.0
    %1498 = vmatpush1.xpose.msra.mxu0 %v844
    %1499 = vmatprep.subr.mxu0 0.0
    %1500 = vmatpush1.xpose.msra.mxu0 %v847
    %1501 = vmatprep.subr.mxu0 0.0
    %1502 = vmatpush1.xpose.msra.mxu0 %v850
    %1503 = vmatprep.subr.mxu0 0.0
    %1504 = vmatpush1.xpose.msra.mxu0 %v853
    %1505 = vmatprep.subr.mxu0 0.0
    %1506 = vmatpush1.xpose.msra.mxu0 %v856
    %1507 = vmatprep.subr.mxu0 0.0
    %1508 = vmatpush1.xpose.msra.mxu0 %v859
    %1509 = vmatprep.subr.mxu0 0.0
    %1510 = vmatpush1.xpose.msra.mxu0 %v862
    %1511 = vmatprep.subr.mxu0 0.0
    %1512 = vmatpush1.xpose.msra.mxu0 %v865
    %1513 = vmatprep.subr.mxu0 0.0
    %1514 = vmatpush1.xpose.msra.mxu0 %v868
    %1515 = vmatprep.subr.mxu0 0.0
    %1516 = vmatpush1.xpose.msra.mxu0 %v871
    %1517 = vmatprep.subr.mxu0 0.0
    %1518 = vmatpush1.xpose.msra.mxu0 %v874
    %1519 = vmatprep.subr.mxu0 0.0
    %1520 = vmatpush1.xpose.msra.mxu0 %v877
    %1521 = vmatprep.subr.mxu0 0.0
    %1522 = vmatpush1.xpose.msra.mxu0 %v880
    %1523 = vmatprep.mubr.f32.mxu0 0.0
    %1524 = vmatmul.mubr.f32.gmra.mrb[0].mxu0 %v301
    %v1525 = vpop.f32.mrb[0].mxu0
    %v1526 = vadd.f32 %v292, %v1525
    %v1527 = vpop.f32.mrb[0].mxu0
    %v1528 = vadd.f32 %v292, %v1527
    %1529 = vmatprep.mubr.f32.mxu0 0.0
    %1530 = vmatmul.mubr.f32.gmra.mrb[0].mxu0 %v304
    %v1531 = vpop.f32.mrb[0].mxu0
    %v1532 = vadd.f32 %v297, %v1531
    %v1533 = vpop.f32.mrb[0].mxu0
    %v1534 = vadd.f32 %v297, %v1533
    %1535 = vdwg.mxu0
    %1536 = vmatprep.subr.mxu0 0.0
    %1537 = vmatpush1.xpose.msra.mxu0 %v883
    %1538 = vmatprep.subr.mxu0 0.0
    %1539 = vmatpush1.xpose.msra.mxu0 %v886
    %1540 = vmatprep.subr.mxu0 0.0
    %1541 = vmatpush1.xpose.msra.mxu0 %v889
    %1542 = vmatprep.subr.mxu0 0.0
    %1543 = vmatpush1.xpose.msra.mxu0 %v892
    %1544 = vmatprep.subr.mxu0 0.0
    %1545 = vmatpush1.xpose.msra.mxu0 %v895
    %1546 = vmatprep.subr.mxu0 0.0
    %1547 = vmatpush1.xpose.msra.mxu0 %v898
    %1548 = vmatprep.subr.mxu0 0.0
    %1549 = vmatpush1.xpose.msra.mxu0 %v901
    %1550 = vmatprep.subr.mxu0 0.0
    %1551 = vmatpush1.xpose.msra.mxu0 %v904
    %1552 = vmatprep.subr.mxu0 0.0
    %1553 = vmatpush1.xpose.msra.mxu0 %v907
    %1554 = vmatprep.subr.mxu0 0.0
    %1555 = vmatpush1.xpose.msra.mxu0 %v910
    %1556 = vmatprep.subr.mxu0 0.0
    %1557 = vmatpush1.xpose.msra.mxu0 %v913
    %1558 = vmatprep.subr.mxu0 0.0
    %1559 = vmatpush1.xpose.msra.mxu0 %v916
    %1560 = vmatprep.subr.mxu0 0.0
    %1561 = vmatpush1.xpose.msra.mxu0 %v919
    %1562 = vmatprep.subr.mxu0 0.0
    %1563 = vmatpush1.xpose.msra.mxu0 %v922
    %1564 = vmatprep.subr.mxu0 0.0
    %1565 = vmatpush1.xpose.msra.mxu0 %v925
    %1566 = vmatprep.subr.mxu0 0.0
    %1567 = vmatpush1.xpose.msra.mxu0 %v928
    %1568 = vmatprep.subr.mxu0 0.0
    %1569 = vmatpush1.xpose.msra.mxu0 %v931
    %1570 = vmatprep.subr.mxu0 0.0
    %1571 = vmatpush1.xpose.msra.mxu0 %v934
    %1572 = vmatprep.subr.mxu0 0.0
    %1573 = vmatpush1.xpose.msra.mxu0 %v937
    %1574 = vmatprep.subr.mxu0 0.0
    %1575 = vmatpush1.xpose.msra.mxu0 %v940
    %1576 = vmatprep.subr.mxu0 0.0
    %1577 = vmatpush1.xpose.msra.mxu0 %v943
    %1578 = vmatprep.subr.mxu0 0.0
    %1579 = vmatpush1.xpose.msra.mxu0 %v946
    %1580 = vmatprep.subr.mxu0 0.0
    %1581 = vmatpush1.xpose.msra.mxu0 %v949
    %1582 = vmatprep.subr.mxu0 0.0
    %1583 = vmatpush1.xpose.msra.mxu0 %v952
    %1584 = vmatprep.subr.mxu0 0.0
    %1585 = vmatpush1.xpose.msra.mxu0 %v955
    %1586 = vmatprep.subr.mxu0 0.0
    %1587 = vmatpush1.xpose.msra.mxu0 %v958
    %1588 = vmatprep.subr.mxu0 0.0
    %1589 = vmatpush1.xpose.msra.mxu0 %v961
    %1590 = vmatprep.subr.mxu0 0.0
    %1591 = vmatpush1.xpose.msra.mxu0 %v964
    %1592 = vmatprep.subr.mxu0 0.0
    %1593 = vmatpush1.xpose.msra.mxu0 %v967
    %1594 = vmatprep.subr.mxu0 0.0
    %1595 = vmatpush1.xpose.msra.mxu0 %v970
    %1596 = vmatprep.subr.mxu0 0.0
    %1597 = vmatpush1.xpose.msra.mxu0 %v973
    %1598 = vmatprep.subr.mxu0 0.0
    %1599 = vmatpush1.xpose.msra.mxu0 %v976
    %1600 = vmatprep.mubr.f32.mxu0 0.0
    %1601 = vmatmul.mubr.f32.gmra.mrb[0].mxu0 %v301
    %v1602 = vpop.f32.mrb[0].mxu0
    %v1603 = vadd.f32 %v292, %v1602
    %v1604 = vpop.f32.mrb[0].mxu0
    %v1605 = vadd.f32 %v292, %v1604
    %1606 = vmatprep.mubr.f32.mxu0 0.0
    %1607 = vmatmul.mubr.f32.gmra.mrb[0].mxu0 %v304
    %v1608 = vpop.f32.mrb[0].mxu0
    %v1609 = vadd.f32 %v297, %v1608
    %v1610 = vpop.f32.mrb[0].mxu0
    %v1611 = vadd.f32 %v297, %v1610
    %1612 = vdwg.mxu0
    %1613 = vmatprep.subr.mxu0 0.0
    %1614 = vmatpush1.xpose.msra.mxu0 %v979
    %1615 = vmatprep.subr.mxu0 0.0
    %1616 = vmatpush1.xpose.msra.mxu0 %v982
    %1617 = vmatprep.subr.mxu0 0.0
    %1618 = vmatpush1.xpose.msra.mxu0 %v985
    %1619 = vmatprep.subr.mxu0 0.0
    %1620 = vmatpush1.xpose.msra.mxu0 %v988
    %1621 = vmatprep.subr.mxu0 0.0
    %1622 = vmatpush1.xpose.msra.mxu0 %v991
    %1623 = vmatprep.subr.mxu0 0.0
    %1624 = vmatpush1.xpose.msra.mxu0 %v994
    %1625 = vmatprep.subr.mxu0 0.0
    %1626 = vmatpush1.xpose.msra.mxu0 %v997
    %1627 = vmatprep.subr.mxu0 0.0
    %1628 = vmatpush1.xpose.msra.mxu0 %v1000
    %1629 = vmatprep.subr.mxu0 0.0
    %1630 = vmatpush1.xpose.msra.mxu0 %v1003
    %1631 = vmatprep.subr.mxu0 0.0
    %1632 = vmatpush1.xpose.msra.mxu0 %v1006
    %1633 = vmatprep.subr.mxu0 0.0
    %1634 = vmatpush1.xpose.msra.mxu0 %v1009
    %1635 = vmatprep.subr.mxu0 0.0
    %1636 = vmatpush1.xpose.msra.mxu0 %v1012
    %1637 = vmatprep.subr.mxu0 0.0
    %1638 = vmatpush1.xpose.msra.mxu0 %v1015
    %1639 = vmatprep.subr.mxu0 0.0
    %1640 = vmatpush1.xpose.msra.mxu0 %v1018
    %1641 = vmatprep.subr.mxu0 0.0
    %1642 = vmatpush1.xpose.msra.mxu0 %v1021
    %1643 = vmatprep.subr.mxu0 0.0
    %1644 = vmatpush1.xpose.msra.mxu0 %v1024
    %1645 = vmatprep.subr.mxu0 0.0
    %1646 = vmatpush1.xpose.msra.mxu0 %v1027
    %1647 = vmatprep.subr.mxu0 0.0
    %1648 = vmatpush1.xpose.msra.mxu0 %v1030
    %1649 = vmatprep.subr.mxu0 0.0
    %1650 = vmatpush1.xpose.msra.mxu0 %v1033
    %1651 = vmatprep.subr.mxu0 0.0
    %1652 = vmatpush1.xpose.msra.mxu0 %v1036
    %1653 = vmatprep.subr.mxu0 0.0
    %1654 = vmatpush1.xpose.msra.mxu0 %v1039
    %1655 = vmatprep.subr.mxu0 0.0
    %1656 = vmatpush1.xpose.msra.mxu0 %v1042
    %1657 = vmatprep.subr.mxu0 0.0
    %1658 = vmatpush1.xpose.msra.mxu0 %v1045
    %1659 = vmatprep.subr.mxu0 0.0
    %1660 = vmatpush1.xpose.msra.mxu0 %v1048
    %1661 = vmatprep.subr.mxu0 0.0
    %1662 = vmatpush1.xpose.msra.mxu0 %v1051
    %1663 = vmatprep.subr.mxu0 0.0
    %1664 = vmatpush1.xpose.msra.mxu0 %v1054
    %1665 = vmatprep.subr.mxu0 0.0
    %1666 = vmatpush1.xpose.msra.mxu0 %v1057
    %1667 = vmatprep.subr.mxu0 0.0
    %1668 = vmatpush1.xpose.msra.mxu0 %v1060
    %1669 = vmatprep.subr.mxu0 0.0
    %1670 = vmatpush1.xpose.msra.mxu0 %v1063
    %1671 = vmatprep.subr.mxu0 0.0
    %1672 = vmatpush1.xpose.msra.mxu0 %v1066
    %1673 = vmatprep.subr.mxu0 0.0
    %1674 = vmatpush1.xpose.msra.mxu0 %v1069
    %1675 = vmatprep.subr.mxu0 0.0
    %1676 = vmatpush1.xpose.msra.mxu0 %v1072
    %1677 = vmatprep.mubr.f32.mxu0 0.0
    %1678 = vmatmul.mubr.f32.gmra.mrb[0].mxu0 %v301
    %v1679 = vpop.f32.mrb[0].mxu0
    %v1680 = vadd.f32 %v292, %v1679
    %v1681 = vpop.f32.mrb[0].mxu0
    %v1682 = vadd.f32 %v292, %v1681
    %1683 = vmatprep.mubr.f32.mxu0 0.0
    %1684 = vmatmul.mubr.f32.gmra.mrb[0].mxu0 %v304
    %v1685 = vpop.f32.mrb[0].mxu0
    %v1686 = vadd.f32 %v297, %v1685
    %v1687 = vpop.f32.mrb[0].mxu0
    %v1688 = vadd.f32 %v297, %v1687
    %1689 = vdwg.mxu0
    %v1690 = vmax.f32 %v1141, 0.0
    %v1691 = vmax.f32 %v1143, 0.0
    %v1692 = vmax.f32 %v1218, 0.0
    %v1693 = vmax.f32 %v1220, 0.0
    %v1694 = vmax.f32 %v1295, 0.0
    %v1695 = vmax.f32 %v1297, 0.0
    %v1696 = vmax.f32 %v1372, 0.0
    %v1697 = vmax.f32 %v1374, 0.0
    %v1698 = vmax.f32 %v1449, 0.0
    %v1699 = vmax.f32 %v1451, 0.0
    %v1700 = vmax.f32 %v1526, 0.0
    %v1701 = vmax.f32 %v1528, 0.0
    %v1702 = vmax.f32 %v1603, 0.0
    %v1703 = vmax.f32 %v1605, 0.0
    %v1704 = vmax.f32 %v1680, 0.0
    %v1705 = vmax.f32 %v1682, 0.0
    %v1706 = vmax.f32 %v1147, 0.0
    %v1707 = vmax.f32 %v1149, 0.0
    %v1708 = vmax.f32 %v1224, 0.0
    %v1709 = vmax.f32 %v1226, 0.0
    %v1710 = vmax.f32 %v1301, 0.0
    %v1711 = vmax.f32 %v1303, 0.0
    %v1712 = vmax.f32 %v1378, 0.0
    %v1713 = vmax.f32 %v1380, 0.0
    %v1714 = vmax.f32 %v1455, 0.0
    %v1715 = vmax.f32 %v1457, 0.0
    %v1716 = vmax.f32 %v1532, 0.0
    %v1717 = vmax.f32 %v1534, 0.0
    %v1718 = vmax.f32 %v1609, 0.0
    %v1719 = vmax.f32 %v1611, 0.0
    %v1720 = vmax.f32 %v1686, 0.0
    %v1721 = vmax.f32 %v1688, 0.0
    %v1722 = vld [vmem:[%s3] sm:$0xff]
    %v1723 = vld [vmem:[%s4] sm:$0xff]
    %1725 = vset.pattern.permute.xlu0 0
    %1726 = vperm.xlu0 %1725, %v1723
    %v1727 = vpop.permute.xlu0 %1726
    %vm1729 = vcmask 80896
    %v1731 = vsel %vm1729, %v1722, 0
    %vm1733 = vcmask 1041408
    %v1735 = vsel %vm1733, %v1706, 0
    %v1738 = vsel %vm1733, %v1707, 0
    %v1741 = vsel %vm1733, %v1708, 0
    %v1744 = vsel %vm1733, %v1709, 0
    %v1747 = vsel %vm1733, %v1710, 0
    %v1750 = vsel %vm1733, %v1711, 0
    %v1753 = vsel %vm1733, %v1712, 0
    %v1756 = vsel %vm1733, %v1713, 0
    %v1759 = vsel %vm1733, %v1714, 0
    %v1762 = vsel %vm1733, %v1715, 0
    %v1765 = vsel %vm1733, %v1716, 0
    %v1768 = vsel %vm1733, %v1717, 0
    %v1771 = vsel %vm1733, %v1718, 0
    %v1774 = vsel %vm1733, %v1719, 0
    %v1777 = vsel %vm1733, %v1720, 0
    %v1780 = vsel %vm1733, %v1721, 0
    %1782 = vmatprep.subr.mxu0 %v1691
    %1783 = vmatpush1.msra.mxu0 %v1690
    %1784 = vmatprep.subr.mxu0 %v1738
    %1785 = vmatpush1.msra.mxu0 %v1735
    %1786 = vmatprep.subr.mxu0 0.0
    %1787 = vmatpush1.msra.mxu0 0.0
    %1788 = vmatprep.subr.mxu0 0.0
    %1789 = vmatpush1.msra.mxu0 0.0
    %1790 = vmatprep.subr.mxu0 0.0
    %1791 = vmatpush1.msra.mxu0 0.0
    %1792 = vmatprep.subr.mxu0 0.0
    %1793 = vmatpush1.msra.mxu0 0.0
    %1794 = vmatprep.subr.mxu0 0.0
    %1795 = vmatpush1.msra.mxu0 0.0
    %1796 = vmatprep.subr.mxu0 0.0
    %1797 = vmatpush1.msra.mxu0 0.0
    %1798 = vmatprep.subr.mxu0 0.0
    %1799 = vmatpush1.msra.mxu0 0.0
    %1800 = vmatprep.subr.mxu0 0.0
    %1801 = vmatpush1.msra.mxu0 0.0
    %1802 = vmatprep.subr.mxu0 0.0
    %1803 = vmatpush1.msra.mxu0 0.0
    %1804 = vmatprep.subr.mxu0 0.0
    %1805 = vmatpush1.msra.mxu0 0.0
    %1806 = vmatprep.subr.mxu0 0.0
    %1807 = vmatpush1.msra.mxu0 0.0
    %1808 = vmatprep.subr.mxu0 0.0
    %1809 = vmatpush1.msra.mxu0 0.0
    %1810 = vmatprep.subr.mxu0 0.0
    %1811 = vmatpush1.msra.mxu0 0.0
    %1812 = vmatprep.subr.mxu0 0.0
    %1813 = vmatpush1.msra.mxu0 0.0
    %1814 = vmatprep.subr.mxu0 0.0
    %1815 = vmatpush1.msra.mxu0 0.0
    %1816 = vmatprep.subr.mxu0 0.0
    %1817 = vmatpush1.msra.mxu0 0.0
    %1818 = vmatprep.subr.mxu0 0.0
    %1819 = vmatpush1.msra.mxu0 0.0
    %1820 = vmatprep.subr.mxu0 0.0
    %1821 = vmatpush1.msra.mxu0 0.0
    %1822 = vmatprep.subr.mxu0 0.0
    %1823 = vmatpush1.msra.mxu0 0.0
    %1824 = vmatprep.subr.mxu0 0.0
    %1825 = vmatpush1.msra.mxu0 0.0
    %1826 = vmatprep.subr.mxu0 0.0
    %1827 = vmatpush1.msra.mxu0 0.0
    %1828 = vmatprep.subr.mxu0 0.0
    %1829 = vmatpush1.msra.mxu0 0.0
    %1830 = vmatprep.subr.mxu0 0.0
    %1831 = vmatpush1.msra.mxu0 0.0
    %1832 = vmatprep.subr.mxu0 0.0
    %1833 = vmatpush1.msra.mxu0 0.0
    %1834 = vmatprep.subr.mxu0 0.0
    %1835 = vmatpush1.msra.mxu0 0.0
    %1836 = vmatprep.subr.mxu0 0.0
    %1837 = vmatpush1.msra.mxu0 0.0
    %1838 = vmatprep.subr.mxu0 0.0
    %1839 = vmatpush1.msra.mxu0 0.0
    %1840 = vmatprep.subr.mxu0 0.0
    %1841 = vmatpush1.msra.mxu0 0.0
    %1842 = vmatprep.subr.mxu0 0.0
    %1843 = vmatpush1.msra.mxu0 0.0
    %1844 = vmatprep.subr.mxu0 0.0
    %1845 = vmatpush1.msra.mxu0 0.0
    %1846 = vmatprep.mubr.f32.mxu0 0.0
    %1847 = vmatmul.mubr.f32.gmra.mrb[0].mxu0 %v1731
    %v1848 = vpop.f32.mrb[0].mxu0
    %v1849 = vadd.f32 %v1727, %v1848
    %v1850 = vpop.f32.mrb[0].mxu0
    %v1851 = vadd.f32 %v1727, %v1850
    %1852 = vdwg.mxu0
    %1853 = vmatprep.subr.mxu0 %v1693
    %1854 = vmatpush1.msra.mxu0 %v1692
    %1855 = vmatprep.subr.mxu0 %v1744
    %1856 = vmatpush1.msra.mxu0 %v1741
    %1857 = vmatprep.subr.mxu0 0.0
    %1858 = vmatpush1.msra.mxu0 0.0
    %1859 = vmatprep.subr.mxu0 0.0
    %1860 = vmatpush1.msra.mxu0 0.0
    %1861 = vmatprep.subr.mxu0 0.0
    %1862 = vmatpush1.msra.mxu0 0.0
    %1863 = vmatprep.subr.mxu0 0.0
    %1864 = vmatpush1.msra.mxu0 0.0
    %1865 = vmatprep.subr.mxu0 0.0
    %1866 = vmatpush1.msra.mxu0 0.0
    %1867 = vmatprep.subr.mxu0 0.0
    %1868 = vmatpush1.msra.mxu0 0.0
    %1869 = vmatprep.subr.mxu0 0.0
    %1870 = vmatpush1.msra.mxu0 0.0
    %1871 = vmatprep.subr.mxu0 0.0
    %1872 = vmatpush1.msra.mxu0 0.0
    %1873 = vmatprep.subr.mxu0 0.0
    %1874 = vmatpush1.msra.mxu0 0.0
    %1875 = vmatprep.subr.mxu0 0.0
    %1876 = vmatpush1.msra.mxu0 0.0
    %1877 = vmatprep.subr.mxu0 0.0
    %1878 = vmatpush1.msra.mxu0 0.0
    %1879 = vmatprep.subr.mxu0 0.0
    %1880 = vmatpush1.msra.mxu0 0.0
    %1881 = vmatprep.subr.mxu0 0.0
    %1882 = vmatpush1.msra.mxu0 0.0
    %1883 = vmatprep.subr.mxu0 0.0
    %1884 = vmatpush1.msra.mxu0 0.0
    %1885 = vmatprep.subr.mxu0 0.0
    %1886 = vmatpush1.msra.mxu0 0.0
    %1887 = vmatprep.subr.mxu0 0.0
    %1888 = vmatpush1.msra.mxu0 0.0
    %1889 = vmatprep.subr.mxu0 0.0
    %1890 = vmatpush1.msra.mxu0 0.0
    %1891 = vmatprep.subr.mxu0 0.0
    %1892 = vmatpush1.msra.mxu0 0.0
    %1893 = vmatprep.subr.mxu0 0.0
    %1894 = vmatpush1.msra.mxu0 0.0
    %1895 = vmatprep.subr.mxu0 0.0
    %1896 = vmatpush1.msra.mxu0 0.0
    %1897 = vmatprep.subr.mxu0 0.0
    %1898 = vmatpush1.msra.mxu0 0.0
    %1899 = vmatprep.subr.mxu0 0.0
    %1900 = vmatpush1.msra.mxu0 0.0
    %1901 = vmatprep.subr.mxu0 0.0
    %1902 = vmatpush1.msra.mxu0 0.0
    %1903 = vmatprep.subr.mxu0 0.0
    %1904 = vmatpush1.msra.mxu0 0.0
    %1905 = vmatprep.subr.mxu0 0.0
    %1906 = vmatpush1.msra.mxu0 0.0
    %1907 = vmatprep.subr.mxu0 0.0
    %1908 = vmatpush1.msra.mxu0 0.0
    %1909 = vmatprep.subr.mxu0 0.0
    %1910 = vmatpush1.msra.mxu0 0.0
    %1911 = vmatprep.subr.mxu0 0.0
    %1912 = vmatpush1.msra.mxu0 0.0
    %1913 = vmatprep.subr.mxu0 0.0
    %1914 = vmatpush1.msra.mxu0 0.0
    %1915 = vmatprep.subr.mxu0 0.0
    %1916 = vmatpush1.msra.mxu0 0.0
    %1917 = vmatprep.mubr.f32.mxu0 0.0
    %1918 = vmatmul.mubr.f32.gmra.mrb[0].mxu0 %v1731
    %v1919 = vpop.f32.mrb[0].mxu0
    %v1920 = vadd.f32 %v1727, %v1919
    %v1921 = vpop.f32.mrb[0].mxu0
    %v1922 = vadd.f32 %v1727, %v1921
    %1923 = vdwg.mxu0
    %1924 = vmatprep.subr.mxu0 %v1695
    %1925 = vmatpush1.msra.mxu0 %v1694
    %1926 = vmatprep.subr.mxu0 %v1750
    %1927 = vmatpush1.msra.mxu0 %v1747
    %1928 = vmatprep.subr.mxu0 0.0
    %1929 = vmatpush1.msra.mxu0 0.0
    %1930 = vmatprep.subr.mxu0 0.0
    %1931 = vmatpush1.msra.mxu0 0.0
    %1932 = vmatprep.subr.mxu0 0.0
    %1933 = vmatpush1.msra.mxu0 0.0
    %1934 = vmatprep.subr.mxu0 0.0
    %1935 = vmatpush1.msra.mxu0 0.0
    %1936 = vmatprep.subr.mxu0 0.0
    %1937 = vmatpush1.msra.mxu0 0.0
    %1938 = vmatprep.subr.mxu0 0.0
    %1939 = vmatpush1.msra.mxu0 0.0
    %1940 = vmatprep.subr.mxu0 0.0
    %1941 = vmatpush1.msra.mxu0 0.0
    %1942 = vmatprep.subr.mxu0 0.0
    %1943 = vmatpush1.msra.mxu0 0.0
    %1944 = vmatprep.subr.mxu0 0.0
    %1945 = vmatpush1.msra.mxu0 0.0
    %1946 = vmatprep.subr.mxu0 0.0
    %1947 = vmatpush1.msra.mxu0 0.0
    %1948 = vmatprep.subr.mxu0 0.0
    %1949 = vmatpush1.msra.mxu0 0.0
    %1950 = vmatprep.subr.mxu0 0.0
    %1951 = vmatpush1.msra.mxu0 0.0
    %1952 = vmatprep.subr.mxu0 0.0
    %1953 = vmatpush1.msra.mxu0 0.0
    %1954 = vmatprep.subr.mxu0 0.0
    %1955 = vmatpush1.msra.mxu0 0.0
    %1956 = vmatprep.subr.mxu0 0.0
    %1957 = vmatpush1.msra.mxu0 0.0
    %1958 = vmatprep.subr.mxu0 0.0
    %1959 = vmatpush1.msra.mxu0 0.0
    %1960 = vmatprep.subr.mxu0 0.0
    %1961 = vmatpush1.msra.mxu0 0.0
    %1962 = vmatprep.subr.mxu0 0.0
    %1963 = vmatpush1.msra.mxu0 0.0
    %1964 = vmatprep.subr.mxu0 0.0
    %1965 = vmatpush1.msra.mxu0 0.0
    %1966 = vmatprep.subr.mxu0 0.0
    %1967 = vmatpush1.msra.mxu0 0.0
    %1968 = vmatprep.subr.mxu0 0.0
    %1969 = vmatpush1.msra.mxu0 0.0
    %1970 = vmatprep.subr.mxu0 0.0
    %1971 = vmatpush1.msra.mxu0 0.0
    %1972 = vmatprep.subr.mxu0 0.0
    %1973 = vmatpush1.msra.mxu0 0.0
    %1974 = vmatprep.subr.mxu0 0.0
    %1975 = vmatpush1.msra.mxu0 0.0
    %1976 = vmatprep.subr.mxu0 0.0
    %1977 = vmatpush1.msra.mxu0 0.0
    %1978 = vmatprep.subr.mxu0 0.0
    %1979 = vmatpush1.msra.mxu0 0.0
    %1980 = vmatprep.subr.mxu0 0.0
    %1981 = vmatpush1.msra.mxu0 0.0
    %1982 = vmatprep.subr.mxu0 0.0
    %1983 = vmatpush1.msra.mxu0 0.0
    %1984 = vmatprep.subr.mxu0 0.0
    %1985 = vmatpush1.msra.mxu0 0.0
    %1986 = vmatprep.subr.mxu0 0.0
    %1987 = vmatpush1.msra.mxu0 0.0
    %1988 = vmatprep.mubr.f32.mxu0 0.0
    %1989 = vmatmul.mubr.f32.gmra.mrb[0].mxu0 %v1731
    %v1990 = vpop.f32.mrb[0].mxu0
    %v1991 = vadd.f32 %v1727, %v1990
    %v1992 = vpop.f32.mrb[0].mxu0
    %v1993 = vadd.f32 %v1727, %v1992
    %1994 = vdwg.mxu0
    %1995 = vmatprep.subr.mxu0 %v1697
    %1996 = vmatpush1.msra.mxu0 %v1696
    %1997 = vmatprep.subr.mxu0 %v1756
    %1998 = vmatpush1.msra.mxu0 %v1753
    %1999 = vmatprep.subr.mxu0 0.0
    %2000 = vmatpush1.msra.mxu0 0.0
    %2001 = vmatprep.subr.mxu0 0.0
    %2002 = vmatpush1.msra.mxu0 0.0
    %2003 = vmatprep.subr.mxu0 0.0
    %2004 = vmatpush1.msra.mxu0 0.0
    %2005 = vmatprep.subr.mxu0 0.0
    %2006 = vmatpush1.msra.mxu0 0.0
    %2007 = vmatprep.subr.mxu0 0.0
    %2008 = vmatpush1.msra.mxu0 0.0
    %2009 = vmatprep.subr.mxu0 0.0
    %2010 = vmatpush1.msra.mxu0 0.0
    %2011 = vmatprep.subr.mxu0 0.0
    %2012 = vmatpush1.msra.mxu0 0.0
    %2013 = vmatprep.subr.mxu0 0.0
    %2014 = vmatpush1.msra.mxu0 0.0
    %2015 = vmatprep.subr.mxu0 0.0
    %2016 = vmatpush1.msra.mxu0 0.0
    %2017 = vmatprep.subr.mxu0 0.0
    %2018 = vmatpush1.msra.mxu0 0.0
    %2019 = vmatprep.subr.mxu0 0.0
    %2020 = vmatpush1.msra.mxu0 0.0
    %2021 = vmatprep.subr.mxu0 0.0
    %2022 = vmatpush1.msra.mxu0 0.0
    %2023 = vmatprep.subr.mxu0 0.0
    %2024 = vmatpush1.msra.mxu0 0.0
    %2025 = vmatprep.subr.mxu0 0.0
    %2026 = vmatpush1.msra.mxu0 0.0
    %2027 = vmatprep.subr.mxu0 0.0
    %2028 = vmatpush1.msra.mxu0 0.0
    %2029 = vmatprep.subr.mxu0 0.0
    %2030 = vmatpush1.msra.mxu0 0.0
    %2031 = vmatprep.subr.mxu0 0.0
    %2032 = vmatpush1.msra.mxu0 0.0
    %2033 = vmatprep.subr.mxu0 0.0
    %2034 = vmatpush1.msra.mxu0 0.0
    %2035 = vmatprep.subr.mxu0 0.0
    %2036 = vmatpush1.msra.mxu0 0.0
    %2037 = vmatprep.subr.mxu0 0.0
    %2038 = vmatpush1.msra.mxu0 0.0
    %2039 = vmatprep.subr.mxu0 0.0
    %2040 = vmatpush1.msra.mxu0 0.0
    %2041 = vmatprep.subr.mxu0 0.0
    %2042 = vmatpush1.msra.mxu0 0.0
    %2043 = vmatprep.subr.mxu0 0.0
    %2044 = vmatpush1.msra.mxu0 0.0
    %2045 = vmatprep.subr.mxu0 0.0
    %2046 = vmatpush1.msra.mxu0 0.0
    %2047 = vmatprep.subr.mxu0 0.0
    %2048 = vmatpush1.msra.mxu0 0.0
    %2049 = vmatprep.subr.mxu0 0.0
    %2050 = vmatpush1.msra.mxu0 0.0
    %2051 = vmatprep.subr.mxu0 0.0
    %2052 = vmatpush1.msra.mxu0 0.0
    %2053 = vmatprep.subr.mxu0 0.0
    %2054 = vmatpush1.msra.mxu0 0.0
    %2055 = vmatprep.subr.mxu0 0.0
    %2056 = vmatpush1.msra.mxu0 0.0
    %2057 = vmatprep.subr.mxu0 0.0
    %2058 = vmatpush1.msra.mxu0 0.0
    %2059 = vmatprep.mubr.f32.mxu0 0.0
    %2060 = vmatmul.mubr.f32.gmra.mrb[0].mxu0 %v1731
    %v2061 = vpop.f32.mrb[0].mxu0
    %v2062 = vadd.f32 %v1727, %v2061
    %v2063 = vpop.f32.mrb[0].mxu0
    %v2064 = vadd.f32 %v1727, %v2063
    %2065 = vdwg.mxu0
    %2066 = vmatprep.subr.mxu0 %v1699
    %2067 = vmatpush1.msra.mxu0 %v1698
    %2068 = vmatprep.subr.mxu0 %v1762
    %2069 = vmatpush1.msra.mxu0 %v1759
    %2070 = vmatprep.subr.mxu0 0.0
    %2071 = vmatpush1.msra.mxu0 0.0
    %2072 = vmatprep.subr.mxu0 0.0
    %2073 = vmatpush1.msra.mxu0 0.0
    %2074 = vmatprep.subr.mxu0 0.0
    %2075 = vmatpush1.msra.mxu0 0.0
    %2076 = vmatprep.subr.mxu0 0.0
    %2077 = vmatpush1.msra.mxu0 0.0
    %2078 = vmatprep.subr.mxu0 0.0
    %2079 = vmatpush1.msra.mxu0 0.0
    %2080 = vmatprep.subr.mxu0 0.0
    %2081 = vmatpush1.msra.mxu0 0.0
    %2082 = vmatprep.subr.mxu0 0.0
    %2083 = vmatpush1.msra.mxu0 0.0
    %2084 = vmatprep.subr.mxu0 0.0
    %2085 = vmatpush1.msra.mxu0 0.0
    %2086 = vmatprep.subr.mxu0 0.0
    %2087 = vmatpush1.msra.mxu0 0.0
    %2088 = vmatprep.subr.mxu0 0.0
    %2089 = vmatpush1.msra.mxu0 0.0
    %2090 = vmatprep.subr.mxu0 0.0
    %2091 = vmatpush1.msra.mxu0 0.0
    %2092 = vmatprep.subr.mxu0 0.0
    %2093 = vmatpush1.msra.mxu0 0.0
    %2094 = vmatprep.subr.mxu0 0.0
    %2095 = vmatpush1.msra.mxu0 0.0
    %2096 = vmatprep.subr.mxu0 0.0
    %2097 = vmatpush1.msra.mxu0 0.0
    %2098 = vmatprep.subr.mxu0 0.0
    %2099 = vmatpush1.msra.mxu0 0.0
    %2100 = vmatprep.subr.mxu0 0.0
    %2101 = vmatpush1.msra.mxu0 0.0
    %2102 = vmatprep.subr.mxu0 0.0
    %2103 = vmatpush1.msra.mxu0 0.0
    %2104 = vmatprep.subr.mxu0 0.0
    %2105 = vmatpush1.msra.mxu0 0.0
    %2106 = vmatprep.subr.mxu0 0.0
    %2107 = vmatpush1.msra.mxu0 0.0
    %2108 = vmatprep.subr.mxu0 0.0
    %2109 = vmatpush1.msra.mxu0 0.0
    %2110 = vmatprep.subr.mxu0 0.0
    %2111 = vmatpush1.msra.mxu0 0.0
    %2112 = vmatprep.subr.mxu0 0.0
    %2113 = vmatpush1.msra.mxu0 0.0
    %2114 = vmatprep.subr.mxu0 0.0
    %2115 = vmatpush1.msra.mxu0 0.0
    %2116 = vmatprep.subr.mxu0 0.0
    %2117 = vmatpush1.msra.mxu0 0.0
    %2118 = vmatprep.subr.mxu0 0.0
    %2119 = vmatpush1.msra.mxu0 0.0
    %2120 = vmatprep.subr.mxu0 0.0
    %2121 = vmatpush1.msra.mxu0 0.0
    %2122 = vmatprep.subr.mxu0 0.0
    %2123 = vmatpush1.msra.mxu0 0.0
    %2124 = vmatprep.subr.mxu0 0.0
    %2125 = vmatpush1.msra.mxu0 0.0
    %2126 = vmatprep.subr.mxu0 0.0
    %2127 = vmatpush1.msra.mxu0 0.0
    %2128 = vmatprep.subr.mxu0 0.0
    %2129 = vmatpush1.msra.mxu0 0.0
    %2130 = vmatprep.mubr.f32.mxu0 0.0
    %2131 = vmatmul.mubr.f32.gmra.mrb[0].mxu0 %v1731
    %v2132 = vpop.f32.mrb[0].mxu0
    %v2133 = vadd.f32 %v1727, %v2132
    %v2134 = vpop.f32.mrb[0].mxu0
    %v2135 = vadd.f32 %v1727, %v2134
    %2136 = vdwg.mxu0
    %2137 = vmatprep.subr.mxu0 %v1701
    %2138 = vmatpush1.msra.mxu0 %v1700
    %2139 = vmatprep.subr.mxu0 %v1768
    %2140 = vmatpush1.msra.mxu0 %v1765
    %2141 = vmatprep.subr.mxu0 0.0
    %2142 = vmatpush1.msra.mxu0 0.0
    %2143 = vmatprep.subr.mxu0 0.0
    %2144 = vmatpush1.msra.mxu0 0.0
    %2145 = vmatprep.subr.mxu0 0.0
    %2146 = vmatpush1.msra.mxu0 0.0
    %2147 = vmatprep.subr.mxu0 0.0
    %2148 = vmatpush1.msra.mxu0 0.0
    %2149 = vmatprep.subr.mxu0 0.0
    %2150 = vmatpush1.msra.mxu0 0.0
    %2151 = vmatprep.subr.mxu0 0.0
    %2152 = vmatpush1.msra.mxu0 0.0
    %2153 = vmatprep.subr.mxu0 0.0
    %2154 = vmatpush1.msra.mxu0 0.0
    %2155 = vmatprep.subr.mxu0 0.0
    %2156 = vmatpush1.msra.mxu0 0.0
    %2157 = vmatprep.subr.mxu0 0.0
    %2158 = vmatpush1.msra.mxu0 0.0
    %2159 = vmatprep.subr.mxu0 0.0
    %2160 = vmatpush1.msra.mxu0 0.0
    %2161 = vmatprep.subr.mxu0 0.0
    %2162 = vmatpush1.msra.mxu0 0.0
    %2163 = vmatprep.subr.mxu0 0.0
    %2164 = vmatpush1.msra.mxu0 0.0
    %2165 = vmatprep.subr.mxu0 0.0
    %2166 = vmatpush1.msra.mxu0 0.0
    %2167 = vmatprep.subr.mxu0 0.0
    %2168 = vmatpush1.msra.mxu0 0.0
    %2169 = vmatprep.subr.mxu0 0.0
    %2170 = vmatpush1.msra.mxu0 0.0
    %2171 = vmatprep.subr.mxu0 0.0
    %2172 = vmatpush1.msra.mxu0 0.0
    %2173 = vmatprep.subr.mxu0 0.0
    %2174 = vmatpush1.msra.mxu0 0.0
    %2175 = vmatprep.subr.mxu0 0.0
    %2176 = vmatpush1.msra.mxu0 0.0
    %2177 = vmatprep.subr.mxu0 0.0
    %2178 = vmatpush1.msra.mxu0 0.0
    %2179 = vmatprep.subr.mxu0 0.0
    %2180 = vmatpush1.msra.mxu0 0.0
    %2181 = vmatprep.subr.mxu0 0.0
    %2182 = vmatpush1.msra.mxu0 0.0
    %2183 = vmatprep.subr.mxu0 0.0
    %2184 = vmatpush1.msra.mxu0 0.0
    %2185 = vmatprep.subr.mxu0 0.0
    %2186 = vmatpush1.msra.mxu0 0.0
    %2187 = vmatprep.subr.mxu0 0.0
    %2188 = vmatpush1.msra.mxu0 0.0
    %2189 = vmatprep.subr.mxu0 0.0
    %2190 = vmatpush1.msra.mxu0 0.0
    %2191 = vmatprep.subr.mxu0 0.0
    %2192 = vmatpush1.msra.mxu0 0.0
    %2193 = vmatprep.subr.mxu0 0.0
    %2194 = vmatpush1.msra.mxu0 0.0
    %2195 = vmatprep.subr.mxu0 0.0
    %2196 = vmatpush1.msra.mxu0 0.0
    %2197 = vmatprep.subr.mxu0 0.0
    %2198 = vmatpush1.msra.mxu0 0.0
    %2199 = vmatprep.subr.mxu0 0.0
    %2200 = vmatpush1.msra.mxu0 0.0
    %2201 = vmatprep.mubr.f32.mxu0 0.0
    %2202 = vmatmul.mubr.f32.gmra.mrb[0].mxu0 %v1731
    %v2203 = vpop.f32.mrb[0].mxu0
    %v2204 = vadd.f32 %v1727, %v2203
    %v2205 = vpop.f32.mrb[0].mxu0
    %v2206 = vadd.f32 %v1727, %v2205
    %2207 = vdwg.mxu0
    %2208 = vmatprep.subr.mxu0 %v1703
    %2209 = vmatpush1.msra.mxu0 %v1702
    %2210 = vmatprep.subr.mxu0 %v1774
    %2211 = vmatpush1.msra.mxu0 %v1771
    %2212 = vmatprep.subr.mxu0 0.0
    %2213 = vmatpush1.msra.mxu0 0.0
    %2214 = vmatprep.subr.mxu0 0.0
    %2215 = vmatpush1.msra.mxu0 0.0
    %2216 = vmatprep.subr.mxu0 0.0
    %2217 = vmatpush1.msra.mxu0 0.0
    %2218 = vmatprep.subr.mxu0 0.0
    %2219 = vmatpush1.msra.mxu0 0.0
    %2220 = vmatprep.subr.mxu0 0.0
    %2221 = vmatpush1.msra.mxu0 0.0
    %2222 = vmatprep.subr.mxu0 0.0
    %2223 = vmatpush1.msra.mxu0 0.0
    %2224 = vmatprep.subr.mxu0 0.0
    %2225 = vmatpush1.msra.mxu0 0.0
    %2226 = vmatprep.subr.mxu0 0.0
    %2227 = vmatpush1.msra.mxu0 0.0
    %2228 = vmatprep.subr.mxu0 0.0
    %2229 = vmatpush1.msra.mxu0 0.0
    %2230 = vmatprep.subr.mxu0 0.0
    %2231 = vmatpush1.msra.mxu0 0.0
    %2232 = vmatprep.subr.mxu0 0.0
    %2233 = vmatpush1.msra.mxu0 0.0
    %2234 = vmatprep.subr.mxu0 0.0
    %2235 = vmatpush1.msra.mxu0 0.0
    %2236 = vmatprep.subr.mxu0 0.0
    %2237 = vmatpush1.msra.mxu0 0.0
    %2238 = vmatprep.subr.mxu0 0.0
    %2239 = vmatpush1.msra.mxu0 0.0
    %2240 = vmatprep.subr.mxu0 0.0
    %2241 = vmatpush1.msra.mxu0 0.0
    %2242 = vmatprep.subr.mxu0 0.0
    %2243 = vmatpush1.msra.mxu0 0.0
    %2244 = vmatprep.subr.mxu0 0.0
    %2245 = vmatpush1.msra.mxu0 0.0
    %2246 = vmatprep.subr.mxu0 0.0
    %2247 = vmatpush1.msra.mxu0 0.0
    %2248 = vmatprep.subr.mxu0 0.0
    %2249 = vmatpush1.msra.mxu0 0.0
    %2250 = vmatprep.subr.mxu0 0.0
    %2251 = vmatpush1.msra.mxu0 0.0
    %2252 = vmatprep.subr.mxu0 0.0
    %2253 = vmatpush1.msra.mxu0 0.0
    %2254 = vmatprep.subr.mxu0 0.0
    %2255 = vmatpush1.msra.mxu0 0.0
    %2256 = vmatprep.subr.mxu0 0.0
    %2257 = vmatpush1.msra.mxu0 0.0
    %2258 = vmatprep.subr.mxu0 0.0
    %2259 = vmatpush1.msra.mxu0 0.0
    %2260 = vmatprep.subr.mxu0 0.0
    %2261 = vmatpush1.msra.mxu0 0.0
    %2262 = vmatprep.subr.mxu0 0.0
    %2263 = vmatpush1.msra.mxu0 0.0
    %2264 = vmatprep.subr.mxu0 0.0
    %2265 = vmatpush1.msra.mxu0 0.0
    %2266 = vmatprep.subr.mxu0 0.0
    %2267 = vmatpush1.msra.mxu0 0.0
    %2268 = vmatprep.subr.mxu0 0.0
    %2269 = vmatpush1.msra.mxu0 0.0
    %2270 = vmatprep.subr.mxu0 0.0
    %2271 = vmatpush1.msra.mxu0 0.0
    %2272 = vmatprep.mubr.f32.mxu0 0.0
    %2273 = vmatmul.mubr.f32.gmra.mrb[0].mxu0 %v1731
    %v2274 = vpop.f32.mrb[0].mxu0
    %v2275 = vadd.f32 %v1727, %v2274
    %v2276 = vpop.f32.mrb[0].mxu0
    %v2277 = vadd.f32 %v1727, %v2276
    %2278 = vdwg.mxu0
    %2279 = vmatprep.subr.mxu0 %v1705
    %2280 = vmatpush1.msra.mxu0 %v1704
    %2281 = vmatprep.subr.mxu0 %v1780
    %2282 = vmatpush1.msra.mxu0 %v1777
    %2283 = vmatprep.subr.mxu0 0.0
    %2284 = vmatpush1.msra.mxu0 0.0
    %2285 = vmatprep.subr.mxu0 0.0
    %2286 = vmatpush1.msra.mxu0 0.0
    %2287 = vmatprep.subr.mxu0 0.0
    %2288 = vmatpush1.msra.mxu0 0.0
    %2289 = vmatprep.subr.mxu0 0.0
    %2290 = vmatpush1.msra.mxu0 0.0
    %2291 = vmatprep.subr.mxu0 0.0
    %2292 = vmatpush1.msra.mxu0 0.0
    %2293 = vmatprep.subr.mxu0 0.0
    %2294 = vmatpush1.msra.mxu0 0.0
    %2295 = vmatprep.subr.mxu0 0.0
    %2296 = vmatpush1.msra.mxu0 0.0
    %2297 = vmatprep.subr.mxu0 0.0
    %2298 = vmatpush1.msra.mxu0 0.0
    %2299 = vmatprep.subr.mxu0 0.0
    %2300 = vmatpush1.msra.mxu0 0.0
    %2301 = vmatprep.subr.mxu0 0.0
    %2302 = vmatpush1.msra.mxu0 0.0
    %2303 = vmatprep.subr.mxu0 0.0
    %2304 = vmatpush1.msra.mxu0 0.0
    %2305 = vmatprep.subr.mxu0 0.0
    %2306 = vmatpush1.msra.mxu0 0.0
    %2307 = vmatprep.subr.mxu0 0.0
    %2308 = vmatpush1.msra.mxu0 0.0
    %2309 = vmatprep.subr.mxu0 0.0
    %2310 = vmatpush1.msra.mxu0 0.0
    %2311 = vmatprep.subr.mxu0 0.0
    %2312 = vmatpush1.msra.mxu0 0.0
    %2313 = vmatprep.subr.mxu0 0.0
    %2314 = vmatpush1.msra.mxu0 0.0
    %2315 = vmatprep.subr.mxu0 0.0
    %2316 = vmatpush1.msra.mxu0 0.0
    %2317 = vmatprep.subr.mxu0 0.0
    %2318 = vmatpush1.msra.mxu0 0.0
    %2319 = vmatprep.subr.mxu0 0.0
    %2320 = vmatpush1.msra.mxu0 0.0
    %2321 = vmatprep.subr.mxu0 0.0
    %2322 = vmatpush1.msra.mxu0 0.0
    %2323 = vmatprep.subr.mxu0 0.0
    %2324 = vmatpush1.msra.mxu0 0.0
    %2325 = vmatprep.subr.mxu0 0.0
    %2326 = vmatpush1.msra.mxu0 0.0
    %2327 = vmatprep.subr.mxu0 0.0
    %2328 = vmatpush1.msra.mxu0 0.0
    %2329 = vmatprep.subr.mxu0 0.0
    %2330 = vmatpush1.msra.mxu0 0.0
    %2331 = vmatprep.subr.mxu0 0.0
    %2332 = vmatpush1.msra.mxu0 0.0
    %2333 = vmatprep.subr.mxu0 0.0
    %2334 = vmatpush1.msra.mxu0 0.0
    %2335 = vmatprep.subr.mxu0 0.0
    %2336 = vmatpush1.msra.mxu0 0.0
    %2337 = vmatprep.subr.mxu0 0.0
    %2338 = vmatpush1.msra.mxu0 0.0
    %2339 = vmatprep.subr.mxu0 0.0
    %2340 = vmatpush1.msra.mxu0 0.0
    %2341 = vmatprep.subr.mxu0 0.0
    %2342 = vmatpush1.msra.mxu0 0.0
    %2343 = vmatprep.mubr.f32.mxu0 0.0
    %2344 = vmatmul.mubr.f32.gmra.mrb[0].mxu0 %v1731
    %v2345 = vpop.f32.mrb[0].mxu0
    %v2346 = vadd.f32 %v1727, %v2345
    %v2347 = vpop.f32.mrb[0].mxu0
    %v2348 = vadd.f32 %v1727, %v2347
    %2349 = vdwg.mxu0
    %v2350 = vmax.f32 %v1849, 0.0
    %v2351 = vmax.f32 %v1851, 0.0
    %v2352 = vmax.f32 %v1920, 0.0
    %v2353 = vmax.f32 %v1922, 0.0
    %v2354 = vmax.f32 %v1991, 0.0
    %v2355 = vmax.f32 %v1993, 0.0
    %v2356 = vmax.f32 %v2062, 0.0
    %v2357 = vmax.f32 %v2064, 0.0
    %v2358 = vmax.f32 %v2133, 0.0
    %v2359 = vmax.f32 %v2135, 0.0
    %v2360 = vmax.f32 %v2204, 0.0
    %v2361 = vmax.f32 %v2206, 0.0
    %v2362 = vmax.f32 %v2275, 0.0
    %v2363 = vmax.f32 %v2277, 0.0
    %v2364 = vmax.f32 %v2346, 0.0
    %v2365 = vmax.f32 %v2348, 0.0
    %v2366 = vld [vmem:[%s5] sm:$0x1]
    %v2367 = vld [vmem:[#allocation2] sm:$0x1]
    %2369 = vset.pattern.permute.xlu0 0
    %2370 = vperm.xlu0 %2369, %v2367
    %v2371 = vpop.permute.xlu0 %2370
    %v2373 = vlaneseq
    %v2374 = vshrl.u32 %v2373, 7
    %v2375 = vsub.s32 0, %v2374
    %v2376 = vrot.slane %v2371, %v2375
    %vm2377 = vcmask 64512
    %v2379 = vsel %vm2377, %v2366, 0
    %2381 = vmatprep.subr.mxu0 %v2351
    %2382 = vmatpush1.msra.mxu0 %v2350
    %2383 = vmatprep.subr.mxu0 0.0
    %2384 = vmatpush1.msra.mxu0 0.0
    %2385 = vmatprep.subr.mxu0 0.0
    %2386 = vmatpush1.msra.mxu0 0.0
    %2387 = vmatprep.subr.mxu0 0.0
    %2388 = vmatpush1.msra.mxu0 0.0
    %2389 = vmatprep.subr.mxu0 0.0
    %2390 = vmatpush1.msra.mxu0 0.0
    %2391 = vmatprep.subr.mxu0 0.0
    %2392 = vmatpush1.msra.mxu0 0.0
    %2393 = vmatprep.subr.mxu0 0.0
    %2394 = vmatpush1.msra.mxu0 0.0
    %2395 = vmatprep.subr.mxu0 0.0
    %2396 = vmatpush1.msra.mxu0 0.0
    %2397 = vmatprep.subr.mxu0 0.0
    %2398 = vmatpush1.msra.mxu0 0.0
    %2399 = vmatprep.subr.mxu0 0.0
    %2400 = vmatpush1.msra.mxu0 0.0
    %2401 = vmatprep.subr.mxu0 0.0
    %2402 = vmatpush1.msra.mxu0 0.0
    %2403 = vmatprep.subr.mxu0 0.0
    %2404 = vmatpush1.msra.mxu0 0.0
    %2405 = vmatprep.subr.mxu0 0.0
    %2406 = vmatpush1.msra.mxu0 0.0
    %2407 = vmatprep.subr.mxu0 0.0
    %2408 = vmatpush1.msra.mxu0 0.0
    %2409 = vmatprep.subr.mxu0 0.0
    %2410 = vmatpush1.msra.mxu0 0.0
    %2411 = vmatprep.subr.mxu0 0.0
    %2412 = vmatpush1.msra.mxu0 0.0
    %2413 = vmatprep.subr.mxu0 0.0
    %2414 = vmatpush1.msra.mxu0 0.0
    %2415 = vmatprep.subr.mxu0 0.0
    %2416 = vmatpush1.msra.mxu0 0.0
    %2417 = vmatprep.subr.mxu0 0.0
    %2418 = vmatpush1.msra.mxu0 0.0
    %2419 = vmatprep.subr.mxu0 0.0
    %2420 = vmatpush1.msra.mxu0 0.0
    %2421 = vmatprep.subr.mxu0 0.0
    %2422 = vmatpush1.msra.mxu0 0.0
    %2423 = vmatprep.subr.mxu0 0.0
    %2424 = vmatpush1.msra.mxu0 0.0
    %2425 = vmatprep.subr.mxu0 0.0
    %2426 = vmatpush1.msra.mxu0 0.0
    %2427 = vmatprep.subr.mxu0 0.0
    %2428 = vmatpush1.msra.mxu0 0.0
    %2429 = vmatprep.subr.mxu0 0.0
    %2430 = vmatpush1.msra.mxu0 0.0
    %2431 = vmatprep.subr.mxu0 0.0
    %2432 = vmatpush1.msra.mxu0 0.0
    %2433 = vmatprep.subr.mxu0 0.0
    %2434 = vmatpush1.msra.mxu0 0.0
    %2435 = vmatprep.subr.mxu0 0.0
    %2436 = vmatpush1.msra.mxu0 0.0
    %2437 = vmatprep.subr.mxu0 0.0
    %2438 = vmatpush1.msra.mxu0 0.0
    %2439 = vmatprep.subr.mxu0 0.0
    %2440 = vmatpush1.msra.mxu0 0.0
    %2441 = vmatprep.subr.mxu0 0.0
    %2442 = vmatpush1.msra.mxu0 0.0
    %2443 = vmatprep.subr.mxu0 0.0
    %2444 = vmatpush1.msra.mxu0 0.0
    %2445 = vmatprep.mubr.f32.mxu0 0.0
    %2446 = vmatmul.mubr.f32.gmra.mrb[0].mxu0 %v2379
    %v2447 = vpop.f32.mrb[0].mxu0
    %v2448 = vadd.f32 %v2376, %v2447
    %v2449 = vpop.f32.mrb[0].mxu0
    %v2450 = vadd.f32 %v2376, %v2449
    %2451 = vdwg.mxu0
    %2452 = vmatprep.subr.mxu0 %v2353
    %2453 = vmatpush1.msra.mxu0 %v2352
    %2454 = vmatprep.subr.mxu0 0.0
    %2455 = vmatpush1.msra.mxu0 0.0
    %2456 = vmatprep.subr.mxu0 0.0
    %2457 = vmatpush1.msra.mxu0 0.0
    %2458 = vmatprep.subr.mxu0 0.0
    %2459 = vmatpush1.msra.mxu0 0.0
    %2460 = vmatprep.subr.mxu0 0.0
    %2461 = vmatpush1.msra.mxu0 0.0
    %2462 = vmatprep.subr.mxu0 0.0
    %2463 = vmatpush1.msra.mxu0 0.0
    %2464 = vmatprep.subr.mxu0 0.0
    %2465 = vmatpush1.msra.mxu0 0.0
    %2466 = vmatprep.subr.mxu0 0.0
    %2467 = vmatpush1.msra.mxu0 0.0
    %2468 = vmatprep.subr.mxu0 0.0
    %2469 = vmatpush1.msra.mxu0 0.0
    %2470 = vmatprep.subr.mxu0 0.0
    %2471 = vmatpush1.msra.mxu0 0.0
    %2472 = vmatprep.subr.mxu0 0.0
    %2473 = vmatpush1.msra.mxu0 0.0
    %2474 = vmatprep.subr.mxu0 0.0
    %2475 = vmatpush1.msra.mxu0 0.0
    %2476 = vmatprep.subr.mxu0 0.0
    %2477 = vmatpush1.msra.mxu0 0.0
    %2478 = vmatprep.subr.mxu0 0.0
    %2479 = vmatpush1.msra.mxu0 0.0
    %2480 = vmatprep.subr.mxu0 0.0
    %2481 = vmatpush1.msra.mxu0 0.0
    %2482 = vmatprep.subr.mxu0 0.0
    %2483 = vmatpush1.msra.mxu0 0.0
    %2484 = vmatprep.subr.mxu0 0.0
    %2485 = vmatpush1.msra.mxu0 0.0
    %2486 = vmatprep.subr.mxu0 0.0
    %2487 = vmatpush1.msra.mxu0 0.0
    %2488 = vmatprep.subr.mxu0 0.0
    %2489 = vmatpush1.msra.mxu0 0.0
    %2490 = vmatprep.subr.mxu0 0.0
    %2491 = vmatpush1.msra.mxu0 0.0
    %2492 = vmatprep.subr.mxu0 0.0
    %2493 = vmatpush1.msra.mxu0 0.0
    %2494 = vmatprep.subr.mxu0 0.0
    %2495 = vmatpush1.msra.mxu0 0.0
    %2496 = vmatprep.subr.mxu0 0.0
    %2497 = vmatpush1.msra.mxu0 0.0
    %2498 = vmatprep.subr.mxu0 0.0
    %2499 = vmatpush1.msra.mxu0 0.0
    %2500 = vmatprep.subr.mxu0 0.0
    %2501 = vmatpush1.msra.mxu0 0.0
    %2502 = vmatprep.subr.mxu0 0.0
    %2503 = vmatpush1.msra.mxu0 0.0
    %2504 = vmatprep.subr.mxu0 0.0
    %2505 = vmatpush1.msra.mxu0 0.0
    %2506 = vmatprep.subr.mxu0 0.0
    %2507 = vmatpush1.msra.mxu0 0.0
    %2508 = vmatprep.subr.mxu0 0.0
    %2509 = vmatpush1.msra.mxu0 0.0
    %2510 = vmatprep.subr.mxu0 0.0
    %2511 = vmatpush1.msra.mxu0 0.0
    %2512 = vmatprep.subr.mxu0 0.0
    %2513 = vmatpush1.msra.mxu0 0.0
    %2514 = vmatprep.subr.mxu0 0.0
    %2515 = vmatpush1.msra.mxu0 0.0
    %2516 = vmatprep.mubr.f32.mxu0 0.0
    %2517 = vmatmul.mubr.f32.gmra.mrb[0].mxu0 %v2379
    %v2518 = vpop.f32.mrb[0].mxu0
    %v2519 = vadd.f32 %v2376, %v2518
    %v2520 = vpop.f32.mrb[0].mxu0
    %v2521 = vadd.f32 %v2376, %v2520
    %2522 = vdwg.mxu0
    %2523 = vmatprep.subr.mxu0 %v2355
    %2524 = vmatpush1.msra.mxu0 %v2354
    %2525 = vmatprep.subr.mxu0 0.0
    %2526 = vmatpush1.msra.mxu0 0.0
    %2527 = vmatprep.subr.mxu0 0.0
    %2528 = vmatpush1.msra.mxu0 0.0
    %2529 = vmatprep.subr.mxu0 0.0
    %2530 = vmatpush1.msra.mxu0 0.0
    %2531 = vmatprep.subr.mxu0 0.0
    %2532 = vmatpush1.msra.mxu0 0.0
    %2533 = vmatprep.subr.mxu0 0.0
    %2534 = vmatpush1.msra.mxu0 0.0
    %2535 = vmatprep.subr.mxu0 0.0
    %2536 = vmatpush1.msra.mxu0 0.0
    %2537 = vmatprep.subr.mxu0 0.0
    %2538 = vmatpush1.msra.mxu0 0.0
    %2539 = vmatprep.subr.mxu0 0.0
    %2540 = vmatpush1.msra.mxu0 0.0
    %2541 = vmatprep.subr.mxu0 0.0
    %2542 = vmatpush1.msra.mxu0 0.0
    %2543 = vmatprep.subr.mxu0 0.0
    %2544 = vmatpush1.msra.mxu0 0.0
    %2545 = vmatprep.subr.mxu0 0.0
    %2546 = vmatpush1.msra.mxu0 0.0
    %2547 = vmatprep.subr.mxu0 0.0
    %2548 = vmatpush1.msra.mxu0 0.0
    %2549 = vmatprep.subr.mxu0 0.0
    %2550 = vmatpush1.msra.mxu0 0.0
    %2551 = vmatprep.subr.mxu0 0.0
    %2552 = vmatpush1.msra.mxu0 0.0
    %2553 = vmatprep.subr.mxu0 0.0
    %2554 = vmatpush1.msra.mxu0 0.0
    %2555 = vmatprep.subr.mxu0 0.0
    %2556 = vmatpush1.msra.mxu0 0.0
    %2557 = vmatprep.subr.mxu0 0.0
    %2558 = vmatpush1.msra.mxu0 0.0
    %2559 = vmatprep.subr.mxu0 0.0
    %2560 = vmatpush1.msra.mxu0 0.0
    %2561 = vmatprep.subr.mxu0 0.0
    %2562 = vmatpush1.msra.mxu0 0.0
    %2563 = vmatprep.subr.mxu0 0.0
    %2564 = vmatpush1.msra.mxu0 0.0
    %2565 = vmatprep.subr.mxu0 0.0
    %2566 = vmatpush1.msra.mxu0 0.0
    %2567 = vmatprep.subr.mxu0 0.0
    %2568 = vmatpush1.msra.mxu0 0.0
    %2569 = vmatprep.subr.mxu0 0.0
    %2570 = vmatpush1.msra.mxu0 0.0
    %2571 = vmatprep.subr.mxu0 0.0
    %2572 = vmatpush1.msra.mxu0 0.0
    %2573 = vmatprep.subr.mxu0 0.0
    %2574 = vmatpush1.msra.mxu0 0.0
    %2575 = vmatprep.subr.mxu0 0.0
    %2576 = vmatpush1.msra.mxu0 0.0
    %2577 = vmatprep.subr.mxu0 0.0
    %2578 = vmatpush1.msra.mxu0 0.0
    %2579 = vmatprep.subr.mxu0 0.0
    %2580 = vmatpush1.msra.mxu0 0.0
    %2581 = vmatprep.subr.mxu0 0.0
    %2582 = vmatpush1.msra.mxu0 0.0
    %2583 = vmatprep.subr.mxu0 0.0
    %2584 = vmatpush1.msra.mxu0 0.0
    %2585 = vmatprep.subr.mxu0 0.0
    %2586 = vmatpush1.msra.mxu0 0.0
    %2587 = vmatprep.mubr.f32.mxu0 0.0
    %2588 = vmatmul.mubr.f32.gmra.mrb[0].mxu0 %v2379
    %v2589 = vpop.f32.mrb[0].mxu0
    %v2590 = vadd.f32 %v2376, %v2589
    %v2591 = vpop.f32.mrb[0].mxu0
    %v2592 = vadd.f32 %v2376, %v2591
    %2593 = vdwg.mxu0
    %2594 = vmatprep.subr.mxu0 %v2357
    %2595 = vmatpush1.msra.mxu0 %v2356
    %2596 = vmatprep.subr.mxu0 0.0
    %2597 = vmatpush1.msra.mxu0 0.0
    %2598 = vmatprep.subr.mxu0 0.0
    %2599 = vmatpush1.msra.mxu0 0.0
    %2600 = vmatprep.subr.mxu0 0.0
    %2601 = vmatpush1.msra.mxu0 0.0
    %2602 = vmatprep.subr.mxu0 0.0
    %2603 = vmatpush1.msra.mxu0 0.0
    %2604 = vmatprep.subr.mxu0 0.0
    %2605 = vmatpush1.msra.mxu0 0.0
    %2606 = vmatprep.subr.mxu0 0.0
    %2607 = vmatpush1.msra.mxu0 0.0
    %2608 = vmatprep.subr.mxu0 0.0
    %2609 = vmatpush1.msra.mxu0 0.0
    %2610 = vmatprep.subr.mxu0 0.0
    %2611 = vmatpush1.msra.mxu0 0.0
    %2612 = vmatprep.subr.mxu0 0.0
    %2613 = vmatpush1.msra.mxu0 0.0
    %2614 = vmatprep.subr.mxu0 0.0
    %2615 = vmatpush1.msra.mxu0 0.0
    %2616 = vmatprep.subr.mxu0 0.0
    %2617 = vmatpush1.msra.mxu0 0.0
    %2618 = vmatprep.subr.mxu0 0.0
    %2619 = vmatpush1.msra.mxu0 0.0
    %2620 = vmatprep.subr.mxu0 0.0
    %2621 = vmatpush1.msra.mxu0 0.0
    %2622 = vmatprep.subr.mxu0 0.0
    %2623 = vmatpush1.msra.mxu0 0.0
    %2624 = vmatprep.subr.mxu0 0.0
    %2625 = vmatpush1.msra.mxu0 0.0
    %2626 = vmatprep.subr.mxu0 0.0
    %2627 = vmatpush1.msra.mxu0 0.0
    %2628 = vmatprep.subr.mxu0 0.0
    %2629 = vmatpush1.msra.mxu0 0.0
    %2630 = vmatprep.subr.mxu0 0.0
    %2631 = vmatpush1.msra.mxu0 0.0
    %2632 = vmatprep.subr.mxu0 0.0
    %2633 = vmatpush1.msra.mxu0 0.0
    %2634 = vmatprep.subr.mxu0 0.0
    %2635 = vmatpush1.msra.mxu0 0.0
    %2636 = vmatprep.subr.mxu0 0.0
    %2637 = vmatpush1.msra.mxu0 0.0
    %2638 = vmatprep.subr.mxu0 0.0
    %2639 = vmatpush1.msra.mxu0 0.0
    %2640 = vmatprep.subr.mxu0 0.0
    %2641 = vmatpush1.msra.mxu0 0.0
    %2642 = vmatprep.subr.mxu0 0.0
    %2643 = vmatpush1.msra.mxu0 0.0
    %2644 = vmatprep.subr.mxu0 0.0
    %2645 = vmatpush1.msra.mxu0 0.0
    %2646 = vmatprep.subr.mxu0 0.0
    %2647 = vmatpush1.msra.mxu0 0.0
    %2648 = vmatprep.subr.mxu0 0.0
    %2649 = vmatpush1.msra.mxu0 0.0
    %2650 = vmatprep.subr.mxu0 0.0
    %2651 = vmatpush1.msra.mxu0 0.0
    %2652 = vmatprep.subr.mxu0 0.0
    %2653 = vmatpush1.msra.mxu0 0.0
    %2654 = vmatprep.subr.mxu0 0.0
    %2655 = vmatpush1.msra.mxu0 0.0
    %2656 = vmatprep.subr.mxu0 0.0
    %2657 = vmatpush1.msra.mxu0 0.0
    %2658 = vmatprep.mubr.f32.mxu0 0.0
    %2659 = vmatmul.mubr.f32.gmra.mrb[0].mxu0 %v2379
    %v2660 = vpop.f32.mrb[0].mxu0
    %v2661 = vadd.f32 %v2376, %v2660
    %v2662 = vpop.f32.mrb[0].mxu0
    %v2663 = vadd.f32 %v2376, %v2662
    %2664 = vdwg.mxu0
    %2665 = vmatprep.subr.mxu0 %v2359
    %2666 = vmatpush1.msra.mxu0 %v2358
    %2667 = vmatprep.subr.mxu0 0.0
    %2668 = vmatpush1.msra.mxu0 0.0
    %2669 = vmatprep.subr.mxu0 0.0
    %2670 = vmatpush1.msra.mxu0 0.0
    %2671 = vmatprep.subr.mxu0 0.0
    %2672 = vmatpush1.msra.mxu0 0.0
    %2673 = vmatprep.subr.mxu0 0.0
    %2674 = vmatpush1.msra.mxu0 0.0
    %2675 = vmatprep.subr.mxu0 0.0
    %2676 = vmatpush1.msra.mxu0 0.0
    %2677 = vmatprep.subr.mxu0 0.0
    %2678 = vmatpush1.msra.mxu0 0.0
    %2679 = vmatprep.subr.mxu0 0.0
    %2680 = vmatpush1.msra.mxu0 0.0
    %2681 = vmatprep.subr.mxu0 0.0
    %2682 = vmatpush1.msra.mxu0 0.0
    %2683 = vmatprep.subr.mxu0 0.0
    %2684 = vmatpush1.msra.mxu0 0.0
    %2685 = vmatprep.subr.mxu0 0.0
    %2686 = vmatpush1.msra.mxu0 0.0
    %2687 = vmatprep.subr.mxu0 0.0
    %2688 = vmatpush1.msra.mxu0 0.0
    %2689 = vmatprep.subr.mxu0 0.0
    %2690 = vmatpush1.msra.mxu0 0.0
    %2691 = vmatprep.subr.mxu0 0.0
    %2692 = vmatpush1.msra.mxu0 0.0
    %2693 = vmatprep.subr.mxu0 0.0
    %2694 = vmatpush1.msra.mxu0 0.0
    %2695 = vmatprep.subr.mxu0 0.0
    %2696 = vmatpush1.msra.mxu0 0.0
    %2697 = vmatprep.subr.mxu0 0.0
    %2698 = vmatpush1.msra.mxu0 0.0
    %2699 = vmatprep.subr.mxu0 0.0
    %2700 = vmatpush1.msra.mxu0 0.0
    %2701 = vmatprep.subr.mxu0 0.0
    %2702 = vmatpush1.msra.mxu0 0.0
    %2703 = vmatprep.subr.mxu0 0.0
    %2704 = vmatpush1.msra.mxu0 0.0
    %2705 = vmatprep.subr.mxu0 0.0
    %2706 = vmatpush1.msra.mxu0 0.0
    %2707 = vmatprep.subr.mxu0 0.0
    %2708 = vmatpush1.msra.mxu0 0.0
    %2709 = vmatprep.subr.mxu0 0.0
    %2710 = vmatpush1.msra.mxu0 0.0
    %2711 = vmatprep.subr.mxu0 0.0
    %2712 = vmatpush1.msra.mxu0 0.0
    %2713 = vmatprep.subr.mxu0 0.0
    %2714 = vmatpush1.msra.mxu0 0.0
    %2715 = vmatprep.subr.mxu0 0.0
    %2716 = vmatpush1.msra.mxu0 0.0
    %2717 = vmatprep.subr.mxu0 0.0
    %2718 = vmatpush1.msra.mxu0 0.0
    %2719 = vmatprep.subr.mxu0 0.0
    %2720 = vmatpush1.msra.mxu0 0.0
    %2721 = vmatprep.subr.mxu0 0.0
    %2722 = vmatpush1.msra.mxu0 0.0
    %2723 = vmatprep.subr.mxu0 0.0
    %2724 = vmatpush1.msra.mxu0 0.0
    %2725 = vmatprep.subr.mxu0 0.0
    %2726 = vmatpush1.msra.mxu0 0.0
    %2727 = vmatprep.subr.mxu0 0.0
    %2728 = vmatpush1.msra.mxu0 0.0
    %2729 = vmatprep.mubr.f32.mxu0 0.0
    %2730 = vmatmul.mubr.f32.gmra.mrb[0].mxu0 %v2379
    %v2731 = vpop.f32.mrb[0].mxu0
    %v2732 = vadd.f32 %v2376, %v2731
    %v2733 = vpop.f32.mrb[0].mxu0
    %v2734 = vadd.f32 %v2376, %v2733
    %2735 = vdwg.mxu0
    %2736 = vmatprep.subr.mxu0 %v2361
    %2737 = vmatpush1.msra.mxu0 %v2360
    %2738 = vmatprep.subr.mxu0 0.0
    %2739 = vmatpush1.msra.mxu0 0.0
    %2740 = vmatprep.subr.mxu0 0.0
    %2741 = vmatpush1.msra.mxu0 0.0
    %2742 = vmatprep.subr.mxu0 0.0
    %2743 = vmatpush1.msra.mxu0 0.0
    %2744 = vmatprep.subr.mxu0 0.0
    %2745 = vmatpush1.msra.mxu0 0.0
    %2746 = vmatprep.subr.mxu0 0.0
    %2747 = vmatpush1.msra.mxu0 0.0
    %2748 = vmatprep.subr.mxu0 0.0
    %2749 = vmatpush1.msra.mxu0 0.0
    %2750 = vmatprep.subr.mxu0 0.0
    %2751 = vmatpush1.msra.mxu0 0.0
    %2752 = vmatprep.subr.mxu0 0.0
    %2753 = vmatpush1.msra.mxu0 0.0
    %2754 = vmatprep.subr.mxu0 0.0
    %2755 = vmatpush1.msra.mxu0 0.0
    %2756 = vmatprep.subr.mxu0 0.0
    %2757 = vmatpush1.msra.mxu0 0.0
    %2758 = vmatprep.subr.mxu0 0.0
    %2759 = vmatpush1.msra.mxu0 0.0
    %2760 = vmatprep.subr.mxu0 0.0
    %2761 = vmatpush1.msra.mxu0 0.0
    %2762 = vmatprep.subr.mxu0 0.0
    %2763 = vmatpush1.msra.mxu0 0.0
    %2764 = vmatprep.subr.mxu0 0.0
    %2765 = vmatpush1.msra.mxu0 0.0
    %2766 = vmatprep.subr.mxu0 0.0
    %2767 = vmatpush1.msra.mxu0 0.0
    %2768 = vmatprep.subr.mxu0 0.0
    %2769 = vmatpush1.msra.mxu0 0.0
    %2770 = vmatprep.subr.mxu0 0.0
    %2771 = vmatpush1.msra.mxu0 0.0
    %2772 = vmatprep.subr.mxu0 0.0
    %2773 = vmatpush1.msra.mxu0 0.0
    %2774 = vmatprep.subr.mxu0 0.0
    %2775 = vmatpush1.msra.mxu0 0.0
    %2776 = vmatprep.subr.mxu0 0.0
    %2777 = vmatpush1.msra.mxu0 0.0
    %2778 = vmatprep.subr.mxu0 0.0
    %2779 = vmatpush1.msra.mxu0 0.0
    %2780 = vmatprep.subr.mxu0 0.0
    %2781 = vmatpush1.msra.mxu0 0.0
    %2782 = vmatprep.subr.mxu0 0.0
    %2783 = vmatpush1.msra.mxu0 0.0
    %2784 = vmatprep.subr.mxu0 0.0
    %2785 = vmatpush1.msra.mxu0 0.0
    %2786 = vmatprep.subr.mxu0 0.0
    %2787 = vmatpush1.msra.mxu0 0.0
    %2788 = vmatprep.subr.mxu0 0.0
    %2789 = vmatpush1.msra.mxu0 0.0
    %2790 = vmatprep.subr.mxu0 0.0
    %2791 = vmatpush1.msra.mxu0 0.0
    %2792 = vmatprep.subr.mxu0 0.0
    %2793 = vmatpush1.msra.mxu0 0.0
    %2794 = vmatprep.subr.mxu0 0.0
    %2795 = vmatpush1.msra.mxu0 0.0
    %2796 = vmatprep.subr.mxu0 0.0
    %2797 = vmatpush1.msra.mxu0 0.0
    %2798 = vmatprep.subr.mxu0 0.0
    %2799 = vmatpush1.msra.mxu0 0.0
    %2800 = vmatprep.mubr.f32.mxu0 0.0
    %2801 = vmatmul.mubr.f32.gmra.mrb[0].mxu0 %v2379
    %v2802 = vpop.f32.mrb[0].mxu0
    %v2803 = vadd.f32 %v2376, %v2802
    %v2804 = vpop.f32.mrb[0].mxu0
    %v2805 = vadd.f32 %v2376, %v2804
    %2806 = vdwg.mxu0
    %2807 = vmatprep.subr.mxu0 %v2363
    %2808 = vmatpush1.msra.mxu0 %v2362
    %2809 = vmatprep.subr.mxu0 0.0
    %2810 = vmatpush1.msra.mxu0 0.0
    %2811 = vmatprep.subr.mxu0 0.0
    %2812 = vmatpush1.msra.mxu0 0.0
    %2813 = vmatprep.subr.mxu0 0.0
    %2814 = vmatpush1.msra.mxu0 0.0
    %2815 = vmatprep.subr.mxu0 0.0
    %2816 = vmatpush1.msra.mxu0 0.0
    %2817 = vmatprep.subr.mxu0 0.0
    %2818 = vmatpush1.msra.mxu0 0.0
    %2819 = vmatprep.subr.mxu0 0.0
    %2820 = vmatpush1.msra.mxu0 0.0
    %2821 = vmatprep.subr.mxu0 0.0
    %2822 = vmatpush1.msra.mxu0 0.0
    %2823 = vmatprep.subr.mxu0 0.0
    %2824 = vmatpush1.msra.mxu0 0.0
    %2825 = vmatprep.subr.mxu0 0.0
    %2826 = vmatpush1.msra.mxu0 0.0
    %2827 = vmatprep.subr.mxu0 0.0
    %2828 = vmatpush1.msra.mxu0 0.0
    %2829 = vmatprep.subr.mxu0 0.0
    %2830 = vmatpush1.msra.mxu0 0.0
    %2831 = vmatprep.subr.mxu0 0.0
    %2832 = vmatpush1.msra.mxu0 0.0
    %2833 = vmatprep.subr.mxu0 0.0
    %2834 = vmatpush1.msra.mxu0 0.0
    %2835 = vmatprep.subr.mxu0 0.0
    %2836 = vmatpush1.msra.mxu0 0.0
    %2837 = vmatprep.subr.mxu0 0.0
    %2838 = vmatpush1.msra.mxu0 0.0
    %2839 = vmatprep.subr.mxu0 0.0
    %2840 = vmatpush1.msra.mxu0 0.0
    %2841 = vmatprep.subr.mxu0 0.0
    %2842 = vmatpush1.msra.mxu0 0.0
    %2843 = vmatprep.subr.mxu0 0.0
    %2844 = vmatpush1.msra.mxu0 0.0
    %2845 = vmatprep.subr.mxu0 0.0
    %2846 = vmatpush1.msra.mxu0 0.0
    %2847 = vmatprep.subr.mxu0 0.0
    %2848 = vmatpush1.msra.mxu0 0.0
    %2849 = vmatprep.subr.mxu0 0.0
    %2850 = vmatpush1.msra.mxu0 0.0
    %2851 = vmatprep.subr.mxu0 0.0
    %2852 = vmatpush1.msra.mxu0 0.0
    %2853 = vmatprep.subr.mxu0 0.0
    %2854 = vmatpush1.msra.mxu0 0.0
    %2855 = vmatprep.subr.mxu0 0.0
    %2856 = vmatpush1.msra.mxu0 0.0
    %2857 = vmatprep.subr.mxu0 0.0
    %2858 = vmatpush1.msra.mxu0 0.0
    %2859 = vmatprep.subr.mxu0 0.0
    %2860 = vmatpush1.msra.mxu0 0.0
    %2861 = vmatprep.subr.mxu0 0.0
    %2862 = vmatpush1.msra.mxu0 0.0
    %2863 = vmatprep.subr.mxu0 0.0
    %2864 = vmatpush1.msra.mxu0 0.0
    %2865 = vmatprep.subr.mxu0 0.0
    %2866 = vmatpush1.msra.mxu0 0.0
    %2867 = vmatprep.subr.mxu0 0.0
    %2868 = vmatpush1.msra.mxu0 0.0
    %2869 = vmatprep.subr.mxu0 0.0
    %2870 = vmatpush1.msra.mxu0 0.0
    %2871 = vmatprep.mubr.f32.mxu0 0.0
    %2872 = vmatmul.mubr.f32.gmra.mrb[0].mxu0 %v2379
    %v2873 = vpop.f32.mrb[0].mxu0
    %v2874 = vadd.f32 %v2376, %v2873
    %v2875 = vpop.f32.mrb[0].mxu0
    %v2876 = vadd.f32 %v2376, %v2875
    %2877 = vdwg.mxu0
    %2878 = vmatprep.subr.mxu0 %v2365
    %2879 = vmatpush1.msra.mxu0 %v2364
    %2880 = vmatprep.subr.mxu0 0.0
    %2881 = vmatpush1.msra.mxu0 0.0
    %2882 = vmatprep.subr.mxu0 0.0
    %2883 = vmatpush1.msra.mxu0 0.0
    %2884 = vmatprep.subr.mxu0 0.0
    %2885 = vmatpush1.msra.mxu0 0.0
    %2886 = vmatprep.subr.mxu0 0.0
    %2887 = vmatpush1.msra.mxu0 0.0
    %2888 = vmatprep.subr.mxu0 0.0
    %2889 = vmatpush1.msra.mxu0 0.0
    %2890 = vmatprep.subr.mxu0 0.0
    %2891 = vmatpush1.msra.mxu0 0.0
    %2892 = vmatprep.subr.mxu0 0.0
    %2893 = vmatpush1.msra.mxu0 0.0
    %2894 = vmatprep.subr.mxu0 0.0
    %2895 = vmatpush1.msra.mxu0 0.0
    %2896 = vmatprep.subr.mxu0 0.0
    %2897 = vmatpush1.msra.mxu0 0.0
    %2898 = vmatprep.subr.mxu0 0.0
    %2899 = vmatpush1.msra.mxu0 0.0
    %2900 = vmatprep.subr.mxu0 0.0
    %2901 = vmatpush1.msra.mxu0 0.0
    %2902 = vmatprep.subr.mxu0 0.0
    %2903 = vmatpush1.msra.mxu0 0.0
    %2904 = vmatprep.subr.mxu0 0.0
    %2905 = vmatpush1.msra.mxu0 0.0
    %2906 = vmatprep.subr.mxu0 0.0
    %2907 = vmatpush1.msra.mxu0 0.0
    %2908 = vmatprep.subr.mxu0 0.0
    %2909 = vmatpush1.msra.mxu0 0.0
    %2910 = vmatprep.subr.mxu0 0.0
    %2911 = vmatpush1.msra.mxu0 0.0
    %2912 = vmatprep.subr.mxu0 0.0
    %2913 = vmatpush1.msra.mxu0 0.0
    %2914 = vmatprep.subr.mxu0 0.0
    %2915 = vmatpush1.msra.mxu0 0.0
    %2916 = vmatprep.subr.mxu0 0.0
    %2917 = vmatpush1.msra.mxu0 0.0
    %2918 = vmatprep.subr.mxu0 0.0
    %2919 = vmatpush1.msra.mxu0 0.0
    %2920 = vmatprep.subr.mxu0 0.0
    %2921 = vmatpush1.msra.mxu0 0.0
    %2922 = vmatprep.subr.mxu0 0.0
    %2923 = vmatpush1.msra.mxu0 0.0
    %2924 = vmatprep.subr.mxu0 0.0
    %2925 = vmatpush1.msra.mxu0 0.0
    %2926 = vmatprep.subr.mxu0 0.0
    %2927 = vmatpush1.msra.mxu0 0.0
    %2928 = vmatprep.subr.mxu0 0.0
    %2929 = vmatpush1.msra.mxu0 0.0
    %2930 = vmatprep.subr.mxu0 0.0
    %2931 = vmatpush1.msra.mxu0 0.0
    %2932 = vmatprep.subr.mxu0 0.0
    %2933 = vmatpush1.msra.mxu0 0.0
    %2934 = vmatprep.subr.mxu0 0.0
    %2935 = vmatpush1.msra.mxu0 0.0
    %2936 = vmatprep.subr.mxu0 0.0
    %2937 = vmatpush1.msra.mxu0 0.0
    %2938 = vmatprep.subr.mxu0 0.0
    %2939 = vmatpush1.msra.mxu0 0.0
    %2940 = vmatprep.subr.mxu0 0.0
    %2941 = vmatpush1.msra.mxu0 0.0
    %2942 = vmatprep.mubr.f32.mxu0 0.0
    %2943 = vmatmul.mubr.f32.gmra.mrb[0].mxu0 %v2379
    %v2944 = vpop.f32.mrb[0].mxu0
    %v2945 = vadd.f32 %v2376, %v2944
    %v2946 = vpop.f32.mrb[0].mxu0
    %v2947 = vadd.f32 %v2376, %v2946
    %2948 = vdwg.mxu0
    %v2965 = vcombine.low %v2448, %v2450
    %v2966 = vcombine.low %v2519, %v2521
    %v2967 = vcombine.low %v2590, %v2592
    %v2968 = vcombine.low %v2661, %v2663
    %v2970 = vunpack.c.l.s4 1966171168
    %v2971 = vunpack.c.0.s8 %v2970
    %v2972 = vlaneseq
    %v2973 = vshrl.u32 %v2972, 7
    %v2974 = vsub.s32 %v2971, %v2973
    %v2975 = vrot.slane %v2965, %v2974
    %v2977 = vunpack.c.l.s4 1966171168
    %v2978 = vunpack.c.0.s8 %v2977
    %v2979 = vlaneseq
    %v2980 = vshrl.u32 %v2979, 7
    %v2981 = vsub.s32 %v2978, %v2980
    %v2982 = vrot.slane %v2966, %v2981
    %v2984 = vunpack.c.l.s4 1966171168
    %v2985 = vunpack.c.0.s8 %v2984
    %v2986 = vlaneseq
    %v2987 = vshrl.u32 %v2986, 7
    %v2988 = vsub.s32 %v2985, %v2987
    %v2989 = vrot.slane %v2967, %v2988
    %v2991 = vunpack.c.l.s4 1966171168
    %v2992 = vunpack.c.0.s8 %v2991
    %v2993 = vlaneseq
    %v2994 = vshrl.u32 %v2993, 7
    %v2995 = vsub.s32 %v2992, %v2994
    %v2996 = vrot.slane %v2968, %v2995
    %v2997 = vcombine.low %v2975, %v2982
    %v2998 = vcombine.low %v2989, %v2996
    %v3000 = vunpack.c.l.s4 1966171168
    %v3001 = vunpack.c.0.s8 %v3000
    %v3002 = vlaneseq
    %v3003 = vshrl.u32 %v3002, 7
    %v3004 = vsub.s32 %v3001, %v3003
    %v3005 = vrot.slane %v2997, %v3004
    %v3007 = vunpack.c.l.s4 1966171168
    %v3008 = vunpack.c.0.s8 %v3007
    %v3009 = vlaneseq
    %v3010 = vshrl.u32 %v3009, 7
    %v3011 = vsub.s32 %v3008, %v3010
    %v3012 = vrot.slane %v2998, %v3011
    %v3013 = vcombine.low %v3005, %v3012
    %v3014 = vcombine.low %v2732, %v2734
    %v3015 = vcombine.low %v2803, %v2805
    %v3016 = vcombine.low %v2874, %v2876
    %v3017 = vcombine.low %v2945, %v2947
    %v3019 = vunpack.c.l.s4 1966171168
    %v3020 = vunpack.c.0.s8 %v3019
    %v3021 = vlaneseq
    %v3022 = vshrl.u32 %v3021, 7
    %v3023 = vsub.s32 %v3020, %v3022
    %v3024 = vrot.slane %v3014, %v3023
    %v3026 = vunpack.c.l.s4 1966171168
    %v3027 = vunpack.c.0.s8 %v3026
    %v3028 = vlaneseq
    %v3029 = vshrl.u32 %v3028, 7
    %v3030 = vsub.s32 %v3027, %v3029
    %v3031 = vrot.slane %v3015, %v3030
    %v3033 = vunpack.c.l.s4 1966171168
    %v3034 = vunpack.c.0.s8 %v3033
    %v3035 = vlaneseq
    %v3036 = vshrl.u32 %v3035, 7
    %v3037 = vsub.s32 %v3034, %v3036
    %v3038 = vrot.slane %v3016, %v3037
    %v3040 = vunpack.c.l.s4 1966171168
    %v3041 = vunpack.c.0.s8 %v3040
    %v3042 = vlaneseq
    %v3043 = vshrl.u32 %v3042, 7
    %v3044 = vsub.s32 %v3041, %v3043
    %v3045 = vrot.slane %v3017, %v3044
    %v3046 = vcombine.low %v3024, %v3031
    %v3047 = vcombine.low %v3038, %v3045
    %v3049 = vunpack.c.l.s4 1966171168
    %v3050 = vunpack.c.0.s8 %v3049
    %v3051 = vlaneseq
    %v3052 = vshrl.u32 %v3051, 7
    %v3053 = vsub.s32 %v3050, %v3052
    %v3054 = vrot.slane %v3046, %v3053
    %v3056 = vunpack.c.l.s4 1966171168
    %v3057 = vunpack.c.0.s8 %v3056
    %v3058 = vlaneseq
    %v3059 = vshrl.u32 %v3058, 7
    %v3060 = vsub.s32 %v3057, %v3059
    %v3061 = vrot.slane %v3047, %v3060
    %v3062 = vcombine.low %v3054, %v3061
    %3065 = vst [vmem:[#allocation3] sm:$0xff] %v3013
    %3066 = vst [vmem:[#allocation3 + $0x8] sm:$0xff] %v3062
    // Predicated region
    $region30: #{tpu_custom_call.1} parent=1 // pred_check
      _
    $region31: #{tpu_custom_call.1} parent=1 // pred_check_branch
      %3068 = sbr.rel (0) target = $region33
    $region32: #{tpu_custom_call.1} parent=1 // pred_region
      %s3070 = ssub.s32 256, 256
      %3071 = vsyncadd [#allocation4], %s3070
      %s3073 = sshll.u32 [#allocation3], 4
      %s3074 = int_to_ptr.vmem [resolvable:$true] %s3073
      %3076 = dma.vmem_to_hbm [thread:$0]  %s3074, 256, %s7, [#allocation4]
    $region33: #{tpu_custom_call.1} parent=1 // pred_fallthru
      _
    // Predicated region
    $region34: #{tpu_custom_call.1} parent=1 // pred_check
      _
    $region35: #{tpu_custom_call.1} parent=1 // pred_check_branch
      %3078 = sbr.rel (0) target = $region37
    $region36: #{tpu_custom_call.1} parent=1 // pred_region
      %3079 = dma.done [#allocation4], 256
    $region37: #{tpu_custom_call.1} parent=1 // pred_fallthru
      _
    %3080 = vsyncpa [#allocation4], 1

</llo_original>
